<compile_context>
chip_gen: v7x
topology: tpu7x:2x2x1
jax: 0.10.0
libtpu: 0.0.40
codegen_flags: <defaults>
</compile_context>

<pallas_src>
import functools
import math

import jax
import jax.numpy as jnp
from jax.experimental import pallas as pl
from jax.experimental.pallas import tpu as pltpu


def _round_up(x, m):
    return ((x + m - 1) // m) * m


_MAX_TILE = 2048  # rows; (2048, 128) f32 activations are only 1 MB per live temp


def _choose_tile(n_pad8):
    # Tiny batches: one grid step (launch overhead dominates anyway).
    if n_pad8 <= 64:
        return n_pad8
    # Otherwise target an even number of >= 4 grid steps (>= 2 per v7x TensorCore) so
    # the BlockSpec pipeline overlaps DMA with compute on both cores, while keeping the
    # tile <= _MAX_TILE so double-buffered tiles stay well inside scoped VMEM.
    steps = max(4, pl.cdiv(n_pad8, _MAX_TILE))
    steps = steps + (steps % 2)
    return min(_MAX_TILE, _round_up(pl.cdiv(n_pad8, steps), 8))


# --------------------- Fused kernel: embedding + all EncoderLayers ---------------------
def _encoder_fused_kernel(raw_ref, num_ref, wemb_ref,
                          wvo_ref, bvo_ref, g1_ref, be1_ref,
                          w1_ref, b1_ref, w2_ref, b2_ref, g2_ref, be2_ref,
                          out_ref, *, num_layers, d, eps):
    d_pad = wemb_ref.shape[1]
    inv_d = 1.0 / d
    # Lane mask over the zero-padded feature lanes (hoisted once per grid step).
    lane_mask = (jax.lax.broadcasted_iota(jnp.int32, (1, d_pad), 1) < d
                 ).astype(jnp.float32)

    # ---- fused SpatiotemporalEnconder: sin/cos on-chip (EUP), one MXU matmul ----
    raw = raw_ref[...]                       # (tn, 8): lat_rad, lon_rad, month_ang,
    s = jnp.sin(raw)                         #          day_ang, hour_ang, year, am_pm, 1
    c = jnp.cos(raw)
    feats = jnp.concatenate([
        c[:, 0:1] * c[:, 1:2],               # x = cos(lat)cos(lon)
        c[:, 0:1] * s[:, 1:2],               # y = cos(lat)sin(lon)
        s[:, 0:1],                           # z = sin(lat)
        s[:, 2:5],                           # month_sin, day_sin, hour_sin
        c[:, 2:5],                           # month_cos, day_cos, hour_cos
        raw[:, 5:8],                         # year, am_pm, 1.0 (bias column)
        num_ref[...],                        # 7 numerical features
    ], axis=-1)                              # (tn, 19)
    x = jnp.dot(feats, wemb_ref[...],
                preferred_element_type=jnp.float32)          # (tn, d_pad); pad lanes == 0

    def layernorm(h, g, b):
        mean = jnp.sum(h, axis=-1, keepdims=True) * inv_d    # pad lanes are zero
        cen = h - mean
        cm = cen * lane_mask                                  # exclude pad lanes from var
        var = jnp.sum(cm * cm, axis=-1, keepdims=True) * inv_d
        # rsqrt -> EUP slot; gamma/beta are zero-padded so pad lanes stay exactly 0.
        return g * (cen * jax.lax.rsqrt(var + eps)) + b

    # ---- EncoderLayers, activation stays resident on-chip across all layers ----
    for l in range(num_layers):
        # seq_len == 1: softmax over a single finite logit == 1, so attention out == V
        # projection; Wv@Wo folded at trace time into a single matmul.
        # TODO(synk): nn.Dropout is inference-mode identity; training-mode RNG masks are
        # not implemented.
        attn = jnp.dot(x, wvo_ref[l],
                       preferred_element_type=jnp.float32) + bvo_ref[l]
        h = layernorm(attn + x, g1_ref[l], be1_ref[l])

        f = jnp.dot(h, w1_ref[l], preferred_element_type=jnp.float32) + b1_ref[l]
        f = jnp.maximum(f, 0.0)
        f = jnp.dot(f, w2_ref[l], preferred_element_type=jnp.float32) + b2_ref[l]
        x = layernorm(f + h, g2_ref[l], be2_ref[l])

    # Single HBM store of the true-width output (once per tile).
    out_ref[...] = x[:, :d].astype(out_ref.dtype)


def encoder_fused_pallas(raw, num, w_emb, stacked, *, tn, d, eps=1e-5):
    n_pad = raw.shape[0]
    num_layers, d_pad, hid_pad = stacked["w1"].shape

    def full3(a, b, c):
        return pl.BlockSpec((a, b, c), lambda i: (0, 0, 0))

    kernel = functools.partial(_encoder_fused_kernel,
                               num_layers=num_layers, d=d, eps=eps)
    return pl.pallas_call(
        kernel,
        out_shape=jax.ShapeDtypeStruct((n_pad, d), jnp.float32),
        grid=(n_pad // tn,),
        in_specs=[
            pl.BlockSpec((tn, 8), lambda i: (i, 0)),            # raw columns
            pl.BlockSpec((tn, 7), lambda i: (i, 0)),            # numerical features
            pl.BlockSpec(w_emb.shape, lambda i: (0, 0)),        # fused embed weight
            full3(num_layers, d_pad, d_pad),                    # Wv@Wo
            full3(num_layers, 1, d_pad),                        # bvo
            full3(num_layers, 1, d_pad),                        # gamma1
            full3(num_layers, 1, d_pad),                        # beta1
            full3(num_layers, d_pad, hid_pad),                  # W1
            full3(num_layers, 1, hid_pad),                      # b1
            full3(num_layers, hid_pad, d_pad),                  # W2
            full3(num_layers, 1, d_pad),                        # b2
            full3(num_layers, 1, d_pad),                        # gamma2
            full3(num_layers, 1, d_pad),                        # beta2
        ],
        out_specs=pl.BlockSpec((tn, d), lambda i: (i, 0)),
        compiler_params=pltpu.CompilerParams(
            dimension_semantics=("parallel",),
            vmem_limit_bytes=32 * 1024 * 1024,   # covers v5e's smaller default limit
        ),
    )(raw, num, w_emb, stacked["wvo"], stacked["bvo"], stacked["g1"], stacked["be1"],
      stacked["w1"], stacked["b1"], stacked["w2"], stacked["b2"],
      stacked["g2"], stacked["be2"])


# --------------------------- Trace-time weight preparation ---------------------------
def _v_projection(wqkv, bqkv, num_heads):
    """Columns of the fused QKV projection feeding the attention output when
    sequence_length == 1 (exact: softmax over one key is 1)."""
    d = wqkv.shape[0]
    hd = d // num_heads
    cols = jnp.concatenate([jnp.arange(h * 3 * hd + 2 * hd, h * 3 * hd + 3 * hd)
                            for h in range(num_heads)])
    return wqkv[:, cols], bqkv[:, cols]


def _pad2(a, rows, cols):
    return jnp.pad(a, ((0, rows - a.shape[0]), (0, cols - a.shape[1])))


def encoder_forward_pallas(latitude, longitude, month, day, hour, year, am_pm,
                           numerical, mask, params, *, num_heads):
    del mask  # seq_len == 1: any *finite* mask cannot change a 1-key softmax.
    n = latitude.shape[0]
    d = params["wp"].shape[1]
    hid = params["layers"][0]["w1"].shape[1] if params["layers"] else d
    d_pad = _round_up(d, 128)
    hid_pad = _round_up(hid, 128)

    # Pack raw columns; angles pre-scaled so the kernel only needs sin/cos.
    raw = jnp.stack([
        jnp.radians(latitude), jnp.radians(longitude),
        (2.0 * jnp.pi / 12.0) * month,
        (2.0 * jnp.pi / 31.0) * day,
        (2.0 * jnp.pi / 24.0) * hour,
        year, am_pm, jnp.ones_like(latitude),
    ], axis=-1).astype(jnp.float32)                                   # (n, 8)
    num = numerical.astype(jnp.float32)                               # (n, 7)

    n_pad8 = _round_up(max(n, 8), 8)
    tn = _choose_tile(n_pad8)
    n_pad = _round_up(n_pad8, tn)
    if n_pad != n:
        raw = jnp.pad(raw, ((0, n_pad - n), (0, 0)))
        num = jnp.pad(num, ((0, n_pad - n), (0, 0)))

    # Fold the three embedding Linears into one (19, d_pad) weight (bias folded in via
    # the constant-1 feature column); zero-padded to the lane-dense width.
    wt = params["wt"]
    w_cat = jnp.concatenate([
        params["wp"],                                 # rows 0-2   : x, y, z
        wt[jnp.array([0, 2, 4]), :],                  # rows 3-5   : month/day/hour sin
        wt[jnp.array([1, 3, 5]), :],                  # rows 6-8   : month/day/hour cos
        wt[6:8, :],                                   # rows 9-10  : year, am_pm
        params["bp"] + params["bt"] + params["bn"],   # row 11     : summed bias
        params["wn"],                                 # rows 12-18 : numerical
    ], axis=0)                                        # (19, d)
    w_emb = jnp.pad(w_cat, ((0, 0), (0, d_pad - d)))

    # Per-layer weights: fold Wv@Wo, zero-pad to lane-dense widths, stack over layers.
    cols = {k: [] for k in ("wvo", "bvo", "g1", "be1", "w1", "b1", "w2", "b2", "g2", "be2")}
    for lp in params["layers"]:
        wv, bv = _v_projection(lp["wqkv"], lp["bqkv"], num_heads)
        wvo = wv @ lp["wo"]
        bvo = bv @ lp["wo"] + lp["bo"]
        cols["wvo"].append(_pad2(wvo, d_pad, d_pad))
        cols["bvo"].append(_pad2(bvo, 1, d_pad))
        cols["g1"].append(_pad2(lp["g1"], 1, d_pad))
        cols["be1"].append(_pad2(lp["be1"], 1, d_pad))
        cols["w1"].append(_pad2(lp["w1"], d_pad, hid_pad))
        cols["b1"].append(_pad2(lp["b1"], 1, hid_pad))
        cols["w2"].append(_pad2(lp["w2"], hid_pad, d_pad))
        cols["b2"].append(_pad2(lp["b2"], 1, d_pad))
        cols["g2"].append(_pad2(lp["g2"], 1, d_pad))
        cols["be2"].append(_pad2(lp["be2"], 1, d_pad))
    stacked = {k: jnp.stack(v, axis=0) for k, v in cols.items()}

    out = encoder_fused_pallas(raw, num, w_emb, stacked, tn=tn, d=d)
    return out[:n].reshape(n, 1, d)


# ----------------------------------- Parameter init -----------------------------------
def init_params(key, d_model, ffn_hidden, num_heads, num_layers):
    del num_heads  # head count only affects the (exact) V-column extraction

    def linear(kw, kb, fan_in, fan_out):
        bound = 1.0 / math.sqrt(fan_in)
        w = jax.random.uniform(kw, (fan_in, fan_out), jnp.float32, -bound, bound)
        b = jax.random.uniform(kb, (1, fan_out), jnp.float32, -bound, bound)
        return w, b

    keys = jax.random.split(key, 6 + 8 * num_layers)
    wp, bp = linear(keys[0], keys[1], 3, d_model)
    wt, bt = linear(keys[2], keys[3], 8, d_model)
    wn, bn = linear(keys[4], keys[5], 7, d_model)
    layers = []
    for l in range(num_layers):
        k = keys[6 + 8 * l: 6 + 8 * (l + 1)]
        wqkv, bqkv = linear(k[0], k[1], d_model, 3 * d_model)
        wo, bo = linear(k[2], k[3], d_model, d_model)
        w1, b1 = linear(k[4], k[5], d_model, ffn_hidden)
        w2, b2 = linear(k[6], k[7], ffn_hidden, d_model)
        layers.append(dict(
            wqkv=wqkv, bqkv=bqkv, wo=wo, bo=bo, w1=w1, b1=b1, w2=w2, b2=b2,
            g1=jnp.ones((1, d_model), jnp.float32), be1=jnp.zeros((1, d_model), jnp.float32),
            g2=jnp.ones((1, d_model), jnp.float32), be2=jnp.zeros((1, d_model), jnp.float32),
        ))
    return dict(wp=wp, bp=bp, wt=wt, bt=bt, wn=wn, bn=bn, layers=layers)


# ------------------------- Pure-JAX reference (faithful path) -------------------------
def _layernorm_ref(x, gamma, beta, eps=1e-5):
    mean = jnp.mean(x, axis=-1, keepdims=True)
    var = jnp.mean((x - mean) ** 2, axis=-1, keepdims=True)
    return gamma * ((x - mean) / jnp.sqrt(var + eps)) + beta


def encoder_forward_reference(latitude, longitude, month, day, hour, year, am_pm,
                              numerical, mask, params, *, num_heads):
    lat_rad = jnp.radians(latitude); lon_rad = jnp.radians(longitude)
    pos = jnp.stack([jnp.cos(lat_rad) * jnp.cos(lon_rad),
                     jnp.cos(lat_rad) * jnp.sin(lon_rad),
                     jnp.sin(lat_rad)], axis=-1)
    time = jnp.stack([
        jnp.sin(2 * jnp.pi * month / 12), jnp.cos(2 * jnp.pi * month / 12),
        jnp.sin(2 * jnp.pi * day / 31), jnp.cos(2 * jnp.pi * day / 31),
        jnp.sin(2 * jnp.pi * hour / 24), jnp.cos(2 * jnp.pi * hour / 24),
        year, am_pm], axis=-1)
    emb = (pos @ params["wp"] + params["bp"]
           + time @ params["wt"] + params["bt"]
           + numerical @ params["wn"] + params["bn"])
    n, d = emb.shape
    x = emb.reshape(n, 1, d)
    hd = d // num_heads
    for lp in params["layers"]:
        qkv = x @ lp["wqkv"] + lp["bqkv"]
        qkv = qkv.reshape(n, 1, num_heads, 3 * hd).transpose(0, 2, 1, 3)
        q, k, v = jnp.split(qkv, 3, axis=-1)
        scaled = jnp.einsum("bhqe,bhke->bhqk", q, k) / math.sqrt(hd)
        scaled = (scaled.transpose(1, 0, 2, 3) + mask).transpose(1, 0, 2, 3)
        attn = jax.nn.softmax(scaled, axis=-1)
        vals = jnp.einsum("bhqk,bhke->bhqe", attn, v)
        vals = vals.transpose(0, 2, 1, 3).reshape(n, 1, d)
        out = vals @ lp["wo"] + lp["bo"]
        x = _layernorm_ref(out + x, lp["g1"], lp["be1"])
        f = jnp.maximum(x @ lp["w1"] + lp["b1"], 0.0) @ lp["w2"] + lp["b2"]
        x = _layernorm_ref(f + x, lp["g2"], lp["be2"])
    return x


# ------------------------------------------ Main ---------------------------------------
if __name__ == "__main__":
    key = jax.random.PRNGKey(0)
    (k_lat, k_lon, k_mo, k_day, k_hr, k_yr, k_ap, k_num, k_par) = jax.random.split(key, 9)

    batch = 16
    d_model = 32
    ffn_hidden = 64
    num_heads = 4
    num_layers = 2

    latitude = jax.random.uniform(k_lat, (batch,), jnp.float32, -90.0, 90.0)
    longitude = jax.random.uniform(k_lon, (batch,), jnp.float32, -180.0, 180.0)
    month = jax.random.randint(k_mo, (batch,), 1, 13).astype(jnp.float32)
    day = jax.random.randint(k_day, (batch,), 1, 32).astype(jnp.float32)
    hour = jax.random.randint(k_hr, (batch,), 0, 24).astype(jnp.float32)
    year = jax.random.randint(k_yr, (batch,), 2018, 2024).astype(jnp.float32)
    am_pm = jax.random.randint(k_ap, (batch,), 0, 2).astype(jnp.float32)
    numerical = jax.random.normal(k_num, (batch, 7), jnp.float32)
    mask = jnp.zeros((1, 1), jnp.float32)   # finite mask precondition (see header)

    params = init_params(k_par, d_model, ffn_hidden, num_heads, num_layers)

    out = encoder_forward_pallas(latitude, longitude, month, day, hour, year, am_pm,
                                 numerical, mask, params, num_heads=num_heads)
    out = jax.block_until_ready(out)

    ref = encoder_forward_reference(latitude, longitude, month, day, hour, year, am_pm,
                                    numerical, mask, params, num_heads=num_heads)
    assert out.shape == (batch, 1, d_model), out.shape
    assert jnp.allclose(out, ref, atol=2e-4, rtol=2e-4), \
        float(jnp.max(jnp.abs(out - ref)))

    print("KERNEL_OK")
</pallas_src>

<mosaic_0001>
module attributes {stable_mosaic.version = 11 : i64} {
  func.func @_encoder_fused_kernel(%arg0: i32, %arg1: memref<16x8xf32, #tpu.memory_space<vmem>>, %arg2: memref<16x7xf32, #tpu.memory_space<vmem>>, %arg3: memref<19x128xf32, #tpu.memory_space<vmem>>, %arg4: memref<2x128x128xf32, #tpu.memory_space<vmem>>, %arg5: memref<2x1x128xf32, #tpu.memory_space<vmem>>, %arg6: memref<2x1x128xf32, #tpu.memory_space<vmem>>, %arg7: memref<2x1x128xf32, #tpu.memory_space<vmem>>, %arg8: memref<2x128x128xf32, #tpu.memory_space<vmem>>, %arg9: memref<2x1x128xf32, #tpu.memory_space<vmem>>, %arg10: memref<2x128x128xf32, #tpu.memory_space<vmem>>, %arg11: memref<2x1x128xf32, #tpu.memory_space<vmem>>, %arg12: memref<2x1x128xf32, #tpu.memory_space<vmem>>, %arg13: memref<2x1x128xf32, #tpu.memory_space<vmem>>, %arg14: memref<16x32xf32, #tpu.memory_space<vmem>>) attributes {dimension_semantics = [#tpu.dimension_semantics<parallel>], iteration_bounds = array<i64: 1>, scalar_prefetch = 0 : i64, scratch_operands = 0 : i64, tpu.core_type = #tpu.core_type<tc>, window_params = [{transform_indices = @transform_0, window_bounds = array<i64: 16, 8>}, {transform_indices = @transform_1, window_bounds = array<i64: 16, 7>}, {pipeline_mode = #tpu.pipeline_mode<synchronous>, transform_indices = @transform_2, window_bounds = array<i64: 19, 128>}, {pipeline_mode = #tpu.pipeline_mode<synchronous>, transform_indices = @transform_3, window_bounds = array<i64: 2, 128, 128>}, {pipeline_mode = #tpu.pipeline_mode<synchronous>, transform_indices = @transform_4, window_bounds = array<i64: 2, 1, 128>}, {pipeline_mode = #tpu.pipeline_mode<synchronous>, transform_indices = @transform_5, window_bounds = array<i64: 2, 1, 128>}, {pipeline_mode = #tpu.pipeline_mode<synchronous>, transform_indices = @transform_6, window_bounds = array<i64: 2, 1, 128>}, {pipeline_mode = #tpu.pipeline_mode<synchronous>, transform_indices = @transform_7, window_bounds = array<i64: 2, 128, 128>}, {pipeline_mode = #tpu.pipeline_mode<synchronous>, transform_indices = @transform_8, window_bounds = array<i64: 2, 1, 128>}, {pipeline_mode = #tpu.pipeline_mode<synchronous>, transform_indices = @transform_9, window_bounds = array<i64: 2, 128, 128>}, {pipeline_mode = #tpu.pipeline_mode<synchronous>, transform_indices = @transform_10, window_bounds = array<i64: 2, 1, 128>}, {pipeline_mode = #tpu.pipeline_mode<synchronous>, transform_indices = @transform_11, window_bounds = array<i64: 2, 1, 128>}, {pipeline_mode = #tpu.pipeline_mode<synchronous>, transform_indices = @transform_12, window_bounds = array<i64: 2, 1, 128>}, {transform_indices = @transform_13, window_bounds = array<i64: 16, 32>}]} {
    %0 = tpu.iota {dimensions = array<i32: 1>} : vector<1x128xi32>
    %c32_i32 = arith.constant 32 : i32
    %1 = vector.broadcast %c32_i32 : i32 to vector<1x128xi32>
    %2 = arith.cmpi slt, %0, %1 : vector<1x128xi32>
    %3 = arith.extui %2 : vector<1x128xi1> to vector<1x128xi32>
    %4 = arith.sitofp %3 : vector<1x128xi32> to vector<1x128xf32>
    %c0 = arith.constant 0 : index
    %c0_0 = arith.constant 0 : index
    %5 = vector.load %arg1[%c0, %c0_0] : memref<16x8xf32, #tpu.memory_space<vmem>>, vector<16x8xf32>
    %6 = math.sin %5 : vector<16x8xf32>
    %7 = math.cos %5 : vector<16x8xf32>
    %8 = vector.extract_strided_slice %7 {offsets = [0, 0], sizes = [16, 1], strides = [1, 1]} : vector<16x8xf32> to vector<16x1xf32>
    %9 = vector.extract_strided_slice %7 {offsets = [0, 1], sizes = [16, 1], strides = [1, 1]} : vector<16x8xf32> to vector<16x1xf32>
    %10 = arith.mulf %8, %9 : vector<16x1xf32>
    %11 = vector.extract_strided_slice %7 {offsets = [0, 0], sizes = [16, 1], strides = [1, 1]} : vector<16x8xf32> to vector<16x1xf32>
    %12 = vector.extract_strided_slice %6 {offsets = [0, 1], sizes = [16, 1], strides = [1, 1]} : vector<16x8xf32> to vector<16x1xf32>
    %13 = arith.mulf %11, %12 : vector<16x1xf32>
    %14 = vector.extract_strided_slice %6 {offsets = [0, 0], sizes = [16, 1], strides = [1, 1]} : vector<16x8xf32> to vector<16x1xf32>
    %15 = vector.extract_strided_slice %6 {offsets = [0, 2], sizes = [16, 3], strides = [1, 1]} : vector<16x8xf32> to vector<16x3xf32>
    %16 = vector.extract_strided_slice %7 {offsets = [0, 2], sizes = [16, 3], strides = [1, 1]} : vector<16x8xf32> to vector<16x3xf32>
    %17 = vector.extract_strided_slice %5 {offsets = [0, 5], sizes = [16, 3], strides = [1, 1]} : vector<16x8xf32> to vector<16x3xf32>
    %c0_1 = arith.constant 0 : index
    %c0_2 = arith.constant 0 : index
    %18 = vector.load %arg2[%c0_1, %c0_2] : memref<16x7xf32, #tpu.memory_space<vmem>>, vector<16x7xf32>
    %19 = tpu.concatenate %10, %13, %14, %15, %16, %17, %18 in 1 : vector<16x1xf32>, vector<16x1xf32>, vector<16x1xf32>, vector<16x3xf32>, vector<16x3xf32>, vector<16x3xf32>, vector<16x7xf32> -> vector<16x19xf32>
    %c0_3 = arith.constant 0 : index
    %c0_4 = arith.constant 0 : index
    %20 = vector.load %arg3[%c0_3, %c0_4] : memref<19x128xf32, #tpu.memory_space<vmem>>, vector<19x128xf32>
    %cst = arith.constant dense<0.000000e+00> : vector<16x128xf32>
    %21 = tpu.matmul %19, %20, %cst {dimension_numbers = #tpu.dot_dimension_numbers<[1], [0], [0], [1], [0, 0, 1, 1], [], []>} : vector<16x19xf32>, vector<19x128xf32>, vector<16x128xf32> -> vector<16x128xf32>
    %c0_5 = arith.constant 0 : index
    %c0_6 = arith.constant 0 : index
    %c0_7 = arith.constant 0 : index
    %22 = vector.load %arg4[%c0_5, %c0_6, %c0_7] : memref<2x128x128xf32, #tpu.memory_space<vmem>>, vector<1x128x128xf32>
    %23 = vector.shape_cast %22 : vector<1x128x128xf32> to vector<128x128xf32>
    %cst_8 = arith.constant dense<0.000000e+00> : vector<16x128xf32>
    %24 = tpu.matmul %21, %23, %cst_8 {dimension_numbers = #tpu.dot_dimension_numbers<[1], [0], [0], [1], [0, 0, 1, 1], [], []>} : vector<16x128xf32>, vector<128x128xf32>, vector<16x128xf32> -> vector<16x128xf32>
    %c0_9 = arith.constant 0 : index
    %c0_10 = arith.constant 0 : index
    %c0_11 = arith.constant 0 : index
    %25 = vector.load %arg5[%c0_9, %c0_10, %c0_11] : memref<2x1x128xf32, #tpu.memory_space<vmem>>, vector<1x1x128xf32>
    %26 = vector.shape_cast %25 : vector<1x1x128xf32> to vector<1x128xf32>
    %27 = vector.broadcast %26 : vector<1x128xf32> to vector<16x128xf32>
    %28 = arith.addf %24, %27 : vector<16x128xf32>
    %29 = arith.addf %28, %21 : vector<16x128xf32>
    %c0_12 = arith.constant 0 : index
    %c0_13 = arith.constant 0 : index
    %c0_14 = arith.constant 0 : index
    %30 = vector.load %arg6[%c0_12, %c0_13, %c0_14] : memref<2x1x128xf32, #tpu.memory_space<vmem>>, vector<1x1x128xf32>
    %31 = vector.shape_cast %30 : vector<1x1x128xf32> to vector<1x128xf32>
    %c0_15 = arith.constant 0 : index
    %c0_16 = arith.constant 0 : index
    %c0_17 = arith.constant 0 : index
    %32 = vector.load %arg7[%c0_15, %c0_16, %c0_17] : memref<2x1x128xf32, #tpu.memory_space<vmem>>, vector<1x1x128xf32>
    %33 = vector.shape_cast %32 : vector<1x1x128xf32> to vector<1x128xf32>
    %cst_18 = arith.constant dense<0.000000e+00> : vector<16xf32>
    %34 = vector.multi_reduction <add>, %29, %cst_18 [1] : vector<16x128xf32> to vector<16xf32>
    %35 = vector.shape_cast %34 : vector<16xf32> to vector<16x1xf32>
    %cst_19 = arith.constant 3.125000e-02 : f32
    %36 = vector.broadcast %cst_19 : f32 to vector<16x1xf32>
    %37 = arith.mulf %35, %36 : vector<16x1xf32>
    %38 = vector.broadcast %37 : vector<16x1xf32> to vector<16x128xf32>
    %39 = arith.subf %29, %38 : vector<16x128xf32>
    %40 = vector.broadcast %4 : vector<1x128xf32> to vector<16x128xf32>
    %41 = arith.mulf %39, %40 : vector<16x128xf32>
    %42 = arith.mulf %41, %41 : vector<16x128xf32>
    %cst_20 = arith.constant dense<0.000000e+00> : vector<16xf32>
    %43 = vector.multi_reduction <add>, %42, %cst_20 [1] : vector<16x128xf32> to vector<16xf32>
    %44 = vector.shape_cast %43 : vector<16xf32> to vector<16x1xf32>
    %cst_21 = arith.constant 3.125000e-02 : f32
    %45 = vector.broadcast %cst_21 : f32 to vector<16x1xf32>
    %46 = arith.mulf %44, %45 : vector<16x1xf32>
    %cst_22 = arith.constant 9.99999974E-6 : f32
    %47 = vector.broadcast %cst_22 : f32 to vector<16x1xf32>
    %48 = arith.addf %46, %47 : vector<16x1xf32>
    %49 = math.rsqrt %48 : vector<16x1xf32>
    %50 = vector.broadcast %49 : vector<16x1xf32> to vector<16x128xf32>
    %51 = arith.mulf %39, %50 : vector<16x128xf32>
    %52 = vector.broadcast %31 : vector<1x128xf32> to vector<16x128xf32>
    %53 = arith.mulf %52, %51 : vector<16x128xf32>
    %54 = vector.broadcast %33 : vector<1x128xf32> to vector<16x128xf32>
    %55 = arith.addf %53, %54 : vector<16x128xf32>
    %c0_23 = arith.constant 0 : index
    %c0_24 = arith.constant 0 : index
    %c0_25 = arith.constant 0 : index
    %56 = vector.load %arg8[%c0_23, %c0_24, %c0_25] : memref<2x128x128xf32, #tpu.memory_space<vmem>>, vector<1x128x128xf32>
    %57 = vector.shape_cast %56 : vector<1x128x128xf32> to vector<128x128xf32>
    %cst_26 = arith.constant dense<0.000000e+00> : vector<16x128xf32>
    %58 = tpu.matmul %55, %57, %cst_26 {dimension_numbers = #tpu.dot_dimension_numbers<[1], [0], [0], [1], [0, 0, 1, 1], [], []>} : vector<16x128xf32>, vector<128x128xf32>, vector<16x128xf32> -> vector<16x128xf32>
    %c0_27 = arith.constant 0 : index
    %c0_28 = arith.constant 0 : index
    %c0_29 = arith.constant 0 : index
    %59 = vector.load %arg9[%c0_27, %c0_28, %c0_29] : memref<2x1x128xf32, #tpu.memory_space<vmem>>, vector<1x1x128xf32>
    %60 = vector.shape_cast %59 : vector<1x1x128xf32> to vector<1x128xf32>
    %61 = vector.broadcast %60 : vector<1x128xf32> to vector<16x128xf32>
    %62 = arith.addf %58, %61 : vector<16x128xf32>
    %cst_30 = arith.constant 0.000000e+00 : f32
    %63 = vector.broadcast %cst_30 : f32 to vector<16x128xf32>
    %64 = arith.maximumf %62, %63 : vector<16x128xf32>
    %c0_31 = arith.constant 0 : index
    %c0_32 = arith.constant 0 : index
    %c0_33 = arith.constant 0 : index
    %65 = vector.load %arg10[%c0_31, %c0_32, %c0_33] : memref<2x128x128xf32, #tpu.memory_space<vmem>>, vector<1x128x128xf32>
    %66 = vector.shape_cast %65 : vector<1x128x128xf32> to vector<128x128xf32>
    %cst_34 = arith.constant dense<0.000000e+00> : vector<16x128xf32>
    %67 = tpu.matmul %64, %66, %cst_34 {dimension_numbers = #tpu.dot_dimension_numbers<[1], [0], [0], [1], [0, 0, 1, 1], [], []>} : vector<16x128xf32>, vector<128x128xf32>, vector<16x128xf32> -> vector<16x128xf32>
    %c0_35 = arith.constant 0 : index
    %c0_36 = arith.constant 0 : index
    %c0_37 = arith.constant 0 : index
    %68 = vector.load %arg11[%c0_35, %c0_36, %c0_37] : memref<2x1x128xf32, #tpu.memory_space<vmem>>, vector<1x1x128xf32>
    %69 = vector.shape_cast %68 : vector<1x1x128xf32> to vector<1x128xf32>
    %70 = vector.broadcast %69 : vector<1x128xf32> to vector<16x128xf32>
    %71 = arith.addf %67, %70 : vector<16x128xf32>
    %72 = arith.addf %71, %55 : vector<16x128xf32>
    %c0_38 = arith.constant 0 : index
    %c0_39 = arith.constant 0 : index
    %c0_40 = arith.constant 0 : index
    %73 = vector.load %arg12[%c0_38, %c0_39, %c0_40] : memref<2x1x128xf32, #tpu.memory_space<vmem>>, vector<1x1x128xf32>
    %74 = vector.shape_cast %73 : vector<1x1x128xf32> to vector<1x128xf32>
    %c0_41 = arith.constant 0 : index
    %c0_42 = arith.constant 0 : index
    %c0_43 = arith.constant 0 : index
    %75 = vector.load %arg13[%c0_41, %c0_42, %c0_43] : memref<2x1x128xf32, #tpu.memory_space<vmem>>, vector<1x1x128xf32>
    %76 = vector.shape_cast %75 : vector<1x1x128xf32> to vector<1x128xf32>
    %cst_44 = arith.constant dense<0.000000e+00> : vector<16xf32>
    %77 = vector.multi_reduction <add>, %72, %cst_44 [1] : vector<16x128xf32> to vector<16xf32>
    %78 = vector.shape_cast %77 : vector<16xf32> to vector<16x1xf32>
    %cst_45 = arith.constant 3.125000e-02 : f32
    %79 = vector.broadcast %cst_45 : f32 to vector<16x1xf32>
    %80 = arith.mulf %78, %79 : vector<16x1xf32>
    %81 = vector.broadcast %80 : vector<16x1xf32> to vector<16x128xf32>
    %82 = arith.subf %72, %81 : vector<16x128xf32>
    %83 = vector.broadcast %4 : vector<1x128xf32> to vector<16x128xf32>
    %84 = arith.mulf %82, %83 : vector<16x128xf32>
    %85 = arith.mulf %84, %84 : vector<16x128xf32>
    %cst_46 = arith.constant dense<0.000000e+00> : vector<16xf32>
    %86 = vector.multi_reduction <add>, %85, %cst_46 [1] : vector<16x128xf32> to vector<16xf32>
    %87 = vector.shape_cast %86 : vector<16xf32> to vector<16x1xf32>
    %cst_47 = arith.constant 3.125000e-02 : f32
    %88 = vector.broadcast %cst_47 : f32 to vector<16x1xf32>
    %89 = arith.mulf %87, %88 : vector<16x1xf32>
    %cst_48 = arith.constant 9.99999974E-6 : f32
    %90 = vector.broadcast %cst_48 : f32 to vector<16x1xf32>
    %91 = arith.addf %89, %90 : vector<16x1xf32>
    %92 = math.rsqrt %91 : vector<16x1xf32>
    %93 = vector.broadcast %92 : vector<16x1xf32> to vector<16x128xf32>
    %94 = arith.mulf %82, %93 : vector<16x128xf32>
    %95 = vector.broadcast %74 : vector<1x128xf32> to vector<16x128xf32>
    %96 = arith.mulf %95, %94 : vector<16x128xf32>
    %97 = vector.broadcast %76 : vector<1x128xf32> to vector<16x128xf32>
    %98 = arith.addf %96, %97 : vector<16x128xf32>
    %c1 = arith.constant 1 : index
    %c0_49 = arith.constant 0 : index
    %c0_50 = arith.constant 0 : index
    %99 = vector.load %arg4[%c1, %c0_49, %c0_50] : memref<2x128x128xf32, #tpu.memory_space<vmem>>, vector<1x128x128xf32>
    %100 = vector.shape_cast %99 : vector<1x128x128xf32> to vector<128x128xf32>
    %cst_51 = arith.constant dense<0.000000e+00> : vector<16x128xf32>
    %101 = tpu.matmul %98, %100, %cst_51 {dimension_numbers = #tpu.dot_dimension_numbers<[1], [0], [0], [1], [0, 0, 1, 1], [], []>} : vector<16x128xf32>, vector<128x128xf32>, vector<16x128xf32> -> vector<16x128xf32>
    %c1_52 = arith.constant 1 : index
    %c0_53 = arith.constant 0 : index
    %c0_54 = arith.constant 0 : index
    %102 = vector.load %arg5[%c1_52, %c0_53, %c0_54] : memref<2x1x128xf32, #tpu.memory_space<vmem>>, vector<1x1x128xf32>
    %103 = vector.shape_cast %102 : vector<1x1x128xf32> to vector<1x128xf32>
    %104 = vector.broadcast %103 : vector<1x128xf32> to vector<16x128xf32>
    %105 = arith.addf %101, %104 : vector<16x128xf32>
    %106 = arith.addf %105, %98 : vector<16x128xf32>
    %c1_55 = arith.constant 1 : index
    %c0_56 = arith.constant 0 : index
    %c0_57 = arith.constant 0 : index
    %107 = vector.load %arg6[%c1_55, %c0_56, %c0_57] : memref<2x1x128xf32, #tpu.memory_space<vmem>>, vector<1x1x128xf32>
    %108 = vector.shape_cast %107 : vector<1x1x128xf32> to vector<1x128xf32>
    %c1_58 = arith.constant 1 : index
    %c0_59 = arith.constant 0 : index
    %c0_60 = arith.constant 0 : index
    %109 = vector.load %arg7[%c1_58, %c0_59, %c0_60] : memref<2x1x128xf32, #tpu.memory_space<vmem>>, vector<1x1x128xf32>
    %110 = vector.shape_cast %109 : vector<1x1x128xf32> to vector<1x128xf32>
    %cst_61 = arith.constant dense<0.000000e+00> : vector<16xf32>
    %111 = vector.multi_reduction <add>, %106, %cst_61 [1] : vector<16x128xf32> to vector<16xf32>
    %112 = vector.shape_cast %111 : vector<16xf32> to vector<16x1xf32>
    %cst_62 = arith.constant 3.125000e-02 : f32
    %113 = vector.broadcast %cst_62 : f32 to vector<16x1xf32>
    %114 = arith.mulf %112, %113 : vector<16x1xf32>
    %115 = vector.broadcast %114 : vector<16x1xf32> to vector<16x128xf32>
    %116 = arith.subf %106, %115 : vector<16x128xf32>
    %117 = vector.broadcast %4 : vector<1x128xf32> to vector<16x128xf32>
    %118 = arith.mulf %116, %117 : vector<16x128xf32>
    %119 = arith.mulf %118, %118 : vector<16x128xf32>
    %cst_63 = arith.constant dense<0.000000e+00> : vector<16xf32>
    %120 = vector.multi_reduction <add>, %119, %cst_63 [1] : vector<16x128xf32> to vector<16xf32>
    %121 = vector.shape_cast %120 : vector<16xf32> to vector<16x1xf32>
    %cst_64 = arith.constant 3.125000e-02 : f32
    %122 = vector.broadcast %cst_64 : f32 to vector<16x1xf32>
    %123 = arith.mulf %121, %122 : vector<16x1xf32>
    %cst_65 = arith.constant 9.99999974E-6 : f32
    %124 = vector.broadcast %cst_65 : f32 to vector<16x1xf32>
    %125 = arith.addf %123, %124 : vector<16x1xf32>
    %126 = math.rsqrt %125 : vector<16x1xf32>
    %127 = vector.broadcast %126 : vector<16x1xf32> to vector<16x128xf32>
    %128 = arith.mulf %116, %127 : vector<16x128xf32>
    %129 = vector.broadcast %108 : vector<1x128xf32> to vector<16x128xf32>
    %130 = arith.mulf %129, %128 : vector<16x128xf32>
    %131 = vector.broadcast %110 : vector<1x128xf32> to vector<16x128xf32>
    %132 = arith.addf %130, %131 : vector<16x128xf32>
    %c1_66 = arith.constant 1 : index
    %c0_67 = arith.constant 0 : index
    %c0_68 = arith.constant 0 : index
    %133 = vector.load %arg8[%c1_66, %c0_67, %c0_68] : memref<2x128x128xf32, #tpu.memory_space<vmem>>, vector<1x128x128xf32>
    %134 = vector.shape_cast %133 : vector<1x128x128xf32> to vector<128x128xf32>
    %cst_69 = arith.constant dense<0.000000e+00> : vector<16x128xf32>
    %135 = tpu.matmul %132, %134, %cst_69 {dimension_numbers = #tpu.dot_dimension_numbers<[1], [0], [0], [1], [0, 0, 1, 1], [], []>} : vector<16x128xf32>, vector<128x128xf32>, vector<16x128xf32> -> vector<16x128xf32>
    %c1_70 = arith.constant 1 : index
    %c0_71 = arith.constant 0 : index
    %c0_72 = arith.constant 0 : index
    %136 = vector.load %arg9[%c1_70, %c0_71, %c0_72] : memref<2x1x128xf32, #tpu.memory_space<vmem>>, vector<1x1x128xf32>
    %137 = vector.shape_cast %136 : vector<1x1x128xf32> to vector<1x128xf32>
    %138 = vector.broadcast %137 : vector<1x128xf32> to vector<16x128xf32>
    %139 = arith.addf %135, %138 : vector<16x128xf32>
    %cst_73 = arith.constant 0.000000e+00 : f32
    %140 = vector.broadcast %cst_73 : f32 to vector<16x128xf32>
    %141 = arith.maximumf %139, %140 : vector<16x128xf32>
    %c1_74 = arith.constant 1 : index
    %c0_75 = arith.constant 0 : index
    %c0_76 = arith.constant 0 : index
    %142 = vector.load %arg10[%c1_74, %c0_75, %c0_76] : memref<2x128x128xf32, #tpu.memory_space<vmem>>, vector<1x128x128xf32>
    %143 = vector.shape_cast %142 : vector<1x128x128xf32> to vector<128x128xf32>
    %cst_77 = arith.constant dense<0.000000e+00> : vector<16x128xf32>
    %144 = tpu.matmul %141, %143, %cst_77 {dimension_numbers = #tpu.dot_dimension_numbers<[1], [0], [0], [1], [0, 0, 1, 1], [], []>} : vector<16x128xf32>, vector<128x128xf32>, vector<16x128xf32> -> vector<16x128xf32>
    %c1_78 = arith.constant 1 : index
    %c0_79 = arith.constant 0 : index
    %c0_80 = arith.constant 0 : index
    %145 = vector.load %arg11[%c1_78, %c0_79, %c0_80] : memref<2x1x128xf32, #tpu.memory_space<vmem>>, vector<1x1x128xf32>
    %146 = vector.shape_cast %145 : vector<1x1x128xf32> to vector<1x128xf32>
    %147 = vector.broadcast %146 : vector<1x128xf32> to vector<16x128xf32>
    %148 = arith.addf %144, %147 : vector<16x128xf32>
    %149 = arith.addf %148, %132 : vector<16x128xf32>
    %c1_81 = arith.constant 1 : index
    %c0_82 = arith.constant 0 : index
    %c0_83 = arith.constant 0 : index
    %150 = vector.load %arg12[%c1_81, %c0_82, %c0_83] : memref<2x1x128xf32, #tpu.memory_space<vmem>>, vector<1x1x128xf32>
    %151 = vector.shape_cast %150 : vector<1x1x128xf32> to vector<1x128xf32>
    %c1_84 = arith.constant 1 : index
    %c0_85 = arith.constant 0 : index
    %c0_86 = arith.constant 0 : index
    %152 = vector.load %arg13[%c1_84, %c0_85, %c0_86] : memref<2x1x128xf32, #tpu.memory_space<vmem>>, vector<1x1x128xf32>
    %153 = vector.shape_cast %152 : vector<1x1x128xf32> to vector<1x128xf32>
    %cst_87 = arith.constant dense<0.000000e+00> : vector<16xf32>
    %154 = vector.multi_reduction <add>, %149, %cst_87 [1] : vector<16x128xf32> to vector<16xf32>
    %155 = vector.shape_cast %154 : vector<16xf32> to vector<16x1xf32>
    %cst_88 = arith.constant 3.125000e-02 : f32
    %156 = vector.broadcast %cst_88 : f32 to vector<16x1xf32>
    %157 = arith.mulf %155, %156 : vector<16x1xf32>
    %158 = vector.broadcast %157 : vector<16x1xf32> to vector<16x128xf32>
    %159 = arith.subf %149, %158 : vector<16x128xf32>
    %160 = vector.broadcast %4 : vector<1x128xf32> to vector<16x128xf32>
    %161 = arith.mulf %159, %160 : vector<16x128xf32>
    %162 = arith.mulf %161, %161 : vector<16x128xf32>
    %cst_89 = arith.constant dense<0.000000e+00> : vector<16xf32>
    %163 = vector.multi_reduction <add>, %162, %cst_89 [1] : vector<16x128xf32> to vector<16xf32>
    %164 = vector.shape_cast %163 : vector<16xf32> to vector<16x1xf32>
    %cst_90 = arith.constant 3.125000e-02 : f32
    %165 = vector.broadcast %cst_90 : f32 to vector<16x1xf32>
    %166 = arith.mulf %164, %165 : vector<16x1xf32>
    %cst_91 = arith.constant 9.99999974E-6 : f32
    %167 = vector.broadcast %cst_91 : f32 to vector<16x1xf32>
    %168 = arith.addf %166, %167 : vector<16x1xf32>
    %169 = math.rsqrt %168 : vector<16x1xf32>
    %170 = vector.broadcast %169 : vector<16x1xf32> to vector<16x128xf32>
    %171 = arith.mulf %159, %170 : vector<16x128xf32>
    %172 = vector.broadcast %151 : vector<1x128xf32> to vector<16x128xf32>
    %173 = arith.mulf %172, %171 : vector<16x128xf32>
    %174 = vector.broadcast %153 : vector<1x128xf32> to vector<16x128xf32>
    %175 = arith.addf %173, %174 : vector<16x128xf32>
    %176 = vector.extract_strided_slice %175 {offsets = [0, 0], sizes = [16, 32], strides = [1, 1]} : vector<16x128xf32> to vector<16x32xf32>
    %c0_92 = arith.constant 0 : index
    %c0_93 = arith.constant 0 : index
    %177 = vector.load %arg14[%c0_92, %c0_93] : memref<16x32xf32, #tpu.memory_space<vmem>>, vector<16x32xf32>
    tpu.vector_store %arg14[%c0_92, %c0_93], %176 {strides = array<i32>} : memref<16x32xf32, #tpu.memory_space<vmem>>, vector<16x32xf32>,
    return
  }
  func.func @transform_0(%arg0: i32) -> (i32, i32) {
    %c0_i32 = arith.constant 0 : i32
    %c0_i32_0 = arith.constant 0 : i32
    return %arg0, %c0_i32 : i32, i32
  }
  func.func @transform_1(%arg0: i32) -> (i32, i32) {
    %c0_i32 = arith.constant 0 : i32
    %c0_i32_0 = arith.constant 0 : i32
    return %arg0, %c0_i32 : i32, i32
  }
  func.func @transform_2(%arg0: i32) -> (i32, i32) {
    %c0_i32 = arith.constant 0 : i32
    %c0_i32_0 = arith.constant 0 : i32
    %c0_i32_1 = arith.constant 0 : i32
    return %c0_i32, %c0_i32_0 : i32, i32
  }
  func.func @transform_3(%arg0: i32) -> (i32, i32, i32) {
    %c0_i32 = arith.constant 0 : i32
    %c0_i32_0 = arith.constant 0 : i32
    %c0_i32_1 = arith.constant 0 : i32
    %c0_i32_2 = arith.constant 0 : i32
    return %c0_i32, %c0_i32_0, %c0_i32_1 : i32, i32, i32
  }
  func.func @transform_4(%arg0: i32) -> (i32, i32, i32) {
    %c0_i32 = arith.constant 0 : i32
    %c0_i32_0 = arith.constant 0 : i32
    %c0_i32_1 = arith.constant 0 : i32
    %c0_i32_2 = arith.constant 0 : i32
    return %c0_i32, %c0_i32_0, %c0_i32_1 : i32, i32, i32
  }
  func.func @transform_5(%arg0: i32) -> (i32, i32, i32) {
    %c0_i32 = arith.constant 0 : i32
    %c0_i32_0 = arith.constant 0 : i32
    %c0_i32_1 = arith.constant 0 : i32
    %c0_i32_2 = arith.constant 0 : i32
    return %c0_i32, %c0_i32_0, %c0_i32_1 : i32, i32, i32
  }
  func.func @transform_6(%arg0: i32) -> (i32, i32, i32) {
    %c0_i32 = arith.constant 0 : i32
    %c0_i32_0 = arith.constant 0 : i32
    %c0_i32_1 = arith.constant 0 : i32
    %c0_i32_2 = arith.constant 0 : i32
    return %c0_i32, %c0_i32_0, %c0_i32_1 : i32, i32, i32
  }
  func.func @transform_7(%arg0: i32) -> (i32, i32, i32) {
    %c0_i32 = arith.constant 0 : i32
    %c0_i32_0 = arith.constant 0 : i32
    %c0_i32_1 = arith.constant 0 : i32
    %c0_i32_2 = arith.constant 0 : i32
    return %c0_i32, %c0_i32_0, %c0_i32_1 : i32, i32, i32
  }
  func.func @transform_8(%arg0: i32) -> (i32, i32, i32) {
    %c0_i32 = arith.constant 0 : i32
    %c0_i32_0 = arith.constant 0 : i32
    %c0_i32_1 = arith.constant 0 : i32
    %c0_i32_2 = arith.constant 0 : i32
    return %c0_i32, %c0_i32_0, %c0_i32_1 : i32, i32, i32
  }
  func.func @transform_9(%arg0: i32) -> (i32, i32, i32) {
    %c0_i32 = arith.constant 0 : i32
    %c0_i32_0 = arith.constant 0 : i32
    %c0_i32_1 = arith.constant 0 : i32
    %c0_i32_2 = arith.constant 0 : i32
    return %c0_i32, %c0_i32_0, %c0_i32_1 : i32, i32, i32
  }
  func.func @transform_10(%arg0: i32) -> (i32, i32, i32) {
    %c0_i32 = arith.constant 0 : i32
    %c0_i32_0 = arith.constant 0 : i32
    %c0_i32_1 = arith.constant 0 : i32
    %c0_i32_2 = arith.constant 0 : i32
    return %c0_i32, %c0_i32_0, %c0_i32_1 : i32, i32, i32
  }
  func.func @transform_11(%arg0: i32) -> (i32, i32, i32) {
    %c0_i32 = arith.constant 0 : i32
    %c0_i32_0 = arith.constant 0 : i32
    %c0_i32_1 = arith.constant 0 : i32
    %c0_i32_2 = arith.constant 0 : i32
    return %c0_i32, %c0_i32_0, %c0_i32_1 : i32, i32, i32
  }
  func.func @transform_12(%arg0: i32) -> (i32, i32, i32) {
    %c0_i32 = arith.constant 0 : i32
    %c0_i32_0 = arith.constant 0 : i32
    %c0_i32_1 = arith.constant 0 : i32
    %c0_i32_2 = arith.constant 0 : i32
    return %c0_i32, %c0_i32_0, %c0_i32_1 : i32, i32, i32
  }
  func.func @transform_13(%arg0: i32) -> (i32, i32) {
    %c0_i32 = arith.constant 0 : i32
    %c0_i32_0 = arith.constant 0 : i32
    return %arg0, %c0_i32 : i32, i32
  }
}

</mosaic_0001>

<llo_original>
// kernel: tpu_custom_call.1
$region0: #{tpu_custom_call.1}
  #allocation0 [shape = 'u32[]', space=smem, size = 0x4, offset = 0x4, fixed_abs, tag = 'smem constant byte address 0x4 - core index']
  #allocation1 [shape = 'u32[144,128]{1,0:T(1,128)}', space=vmem, size = 0x12000, scoped, tag = 'internal scratch']
  %s0 = inlined_call_operand.vmem [shape: f32[16,8], index: 0, kind: input, shape index: {}]
  %s1 = inlined_call_operand.vmem [shape: f32[16,7], index: 1, kind: input, shape index: {}]
  %s2 = inlined_call_operand.vmem [shape: f32[19,128], index: 2, kind: input, shape index: {}]
  %s3 = inlined_call_operand.hbm [shape: f32[2,128,128], index: 3, kind: input, shape index: {}]
  %s4 = inlined_call_operand.vmem [shape: f32[2,1,128], index: 4, kind: input, shape index: {}]
  %s5 = inlined_call_operand.vmem [shape: f32[2,1,128], index: 5, kind: input, shape index: {}]
  %s6 = inlined_call_operand.vmem [shape: f32[2,1,128], index: 6, kind: input, shape index: {}]
  %s7 = inlined_call_operand.hbm [shape: f32[2,128,128], index: 7, kind: input, shape index: {}]
  %s8 = inlined_call_operand.vmem [shape: f32[2,1,128], index: 8, kind: input, shape index: {}]
  %s9 = inlined_call_operand.hbm [shape: f32[2,128,128], index: 9, kind: input, shape index: {}]
  %s10 = inlined_call_operand.vmem [shape: f32[2,1,128], index: 10, kind: input, shape index: {}]
  %s11 = inlined_call_operand.vmem [shape: f32[2,1,128], index: 11, kind: input, shape index: {}]
  %s12 = inlined_call_operand.vmem [shape: f32[2,1,128], index: 12, kind: input, shape index: {}]
  %s13 = inlined_call_operand.hbm [shape: f32[16,32], index: 13, kind: output, shape index: {}]
  %s14 = sld [smem:[#allocation0]]
  $region74: #{tpu_custom_call.1} parent=0
    _
  %s16 = ssub.s32 1, %s14
  %s17 = scalar_select 0, %s16, %s14
  $region1: #{tpu_custom_call.1} parent=0
    #allocation2 [shape = 'u8[131072]{0}', space=vmem, size = 0x20000, scoped, tag = 'input window, operand 3, single buffered']
    #allocation3 [shape = 's32[1]{0}', space=sflag, size = 0x4, scoped, tag = 'scoped memory for tpu_custom_call.1']
    #allocation4 [shape = 's32[1]{0}', space=sflag, size = 0x4, scoped, tag = 'scoped memory for tpu_custom_call.1']
    #allocation5 [shape = 'u8[131072]{0}', space=vmem, size = 0x20000, scoped, tag = 'input window, operand 7, single buffered']
    #allocation6 [shape = 's32[1]{0}', space=sflag, size = 0x4, scoped, tag = 'scoped memory for tpu_custom_call.1']
    #allocation7 [shape = 'u8[131072]{0}', space=vmem, size = 0x20000, scoped, tag = 'input window, operand 9, single buffered']
    #allocation8 [shape = 'u8[8192]{0}', space=vmem, size = 0x2000, scoped, tag = 'output window, operand 0, single buffered']
    %18 = vsyncpa [#allocation3], 0
    %19 = vsyncpa [#allocation6], 0
    %20 = vsyncpa [#allocation4], 0
    // Predicated region
    $region2: #{tpu_custom_call.1} parent=1 // pred_check
      _
    $region3: #{tpu_custom_call.1} parent=1 // pred_check_branch
      %22 = sbr.rel (0) target = $region5
    $region4: #{tpu_custom_call.1} parent=1 // pred_region
      _
    $region5: #{tpu_custom_call.1} parent=1 // pred_fallthru
      _
    // Predicated region
    $region6: #{tpu_custom_call.1} parent=1 // pred_check
      _
    $region7: #{tpu_custom_call.1} parent=1 // pred_check_branch
      %24 = sbr.rel (0) target = $region9
    $region8: #{tpu_custom_call.1} parent=1 // pred_region
      _
    $region9: #{tpu_custom_call.1} parent=1 // pred_fallthru
      _
    // Predicated region
    $region10: #{tpu_custom_call.1} parent=1 // pred_check
      _
    $region11: #{tpu_custom_call.1} parent=1 // pred_check_branch
      %26 = sbr.rel (0) target = $region13
    $region12: #{tpu_custom_call.1} parent=1 // pred_region
      _
    $region13: #{tpu_custom_call.1} parent=1 // pred_fallthru
      _
    // Predicated region
    $region14: #{tpu_custom_call.1} parent=1 // pred_check
      _
    $region15: #{tpu_custom_call.1} parent=1 // pred_check_branch
      %28 = sbr.rel (0) target = $region17
    $region16: #{tpu_custom_call.1} parent=1 // pred_region
      %s30 = ssub.s32 4096, 4096
      %31 = vsyncadd [#allocation3], %s30
      %s32 = sshll.u32 [#allocation2], 4
      %s33 = int_to_ptr.vmem [resolvable:$true] %s32
      %38 = dma.hbm_to_vmem [thread:$0]  %s3, 4096, %s33, [#allocation3], 128, 128, 8
    $region17: #{tpu_custom_call.1} parent=1 // pred_fallthru
      _
    // Predicated region
    $region18: #{tpu_custom_call.1} parent=1 // pred_check
      _
    $region19: #{tpu_custom_call.1} parent=1 // pred_check_branch
      %40 = sbr.rel (0) target = $region21
    $region20: #{tpu_custom_call.1} parent=1 // pred_region
      _
    $region21: #{tpu_custom_call.1} parent=1 // pred_fallthru
      _
    // Predicated region
    $region22: #{tpu_custom_call.1} parent=1 // pred_check
      _
    $region23: #{tpu_custom_call.1} parent=1 // pred_check_branch
      %42 = sbr.rel (0) target = $region25
    $region24: #{tpu_custom_call.1} parent=1 // pred_region
      _
    $region25: #{tpu_custom_call.1} parent=1 // pred_fallthru
      _
    // Predicated region
    $region26: #{tpu_custom_call.1} parent=1 // pred_check
      _
    $region27: #{tpu_custom_call.1} parent=1 // pred_check_branch
      %44 = sbr.rel (0) target = $region29
    $region28: #{tpu_custom_call.1} parent=1 // pred_region
      _
    $region29: #{tpu_custom_call.1} parent=1 // pred_fallthru
      _
    // Predicated region
    $region30: #{tpu_custom_call.1} parent=1 // pred_check
      _
    $region31: #{tpu_custom_call.1} parent=1 // pred_check_branch
      %46 = sbr.rel (0) target = $region33
    $region32: #{tpu_custom_call.1} parent=1 // pred_region
      %s48 = ssub.s32 4096, 4096
      %49 = vsyncadd [#allocation6], %s48
      %s50 = sshll.u32 [#allocation5], 4
      %s51 = int_to_ptr.vmem [resolvable:$true] %s50
      %56 = dma.hbm_to_vmem [thread:$0]  %s7, 4096, %s51, [#allocation6], 128, 128, 8
    $region33: #{tpu_custom_call.1} parent=1 // pred_fallthru
      _
    // Predicated region
    $region34: #{tpu_custom_call.1} parent=1 // pred_check
      _
    $region35: #{tpu_custom_call.1} parent=1 // pred_check_branch
      %58 = sbr.rel (0) target = $region37
    $region36: #{tpu_custom_call.1} parent=1 // pred_region
      _
    $region37: #{tpu_custom_call.1} parent=1 // pred_fallthru
      _
    // Predicated region
    $region38: #{tpu_custom_call.1} parent=1 // pred_check
      _
    $region39: #{tpu_custom_call.1} parent=1 // pred_check_branch
      %60 = sbr.rel (0) target = $region41
    $region40: #{tpu_custom_call.1} parent=1 // pred_region
      %s62 = ssub.s32 4096, 4096
      %63 = vsyncadd [#allocation6], %s62
      %s64 = sshll.u32 [#allocation7], 4
      %s65 = int_to_ptr.vmem [resolvable:$true] %s64
      %70 = dma.hbm_to_vmem [thread:$0]  %s9, 4096, %s65, [#allocation6], 128, 128, 8
    $region41: #{tpu_custom_call.1} parent=1 // pred_fallthru
      _
    // Predicated region
    $region42: #{tpu_custom_call.1} parent=1 // pred_check
      _
    $region43: #{tpu_custom_call.1} parent=1 // pred_check_branch
      %72 = sbr.rel (0) target = $region45
    $region44: #{tpu_custom_call.1} parent=1 // pred_region
      _
    $region45: #{tpu_custom_call.1} parent=1 // pred_fallthru
      _
    // Predicated region
    $region46: #{tpu_custom_call.1} parent=1 // pred_check
      _
    $region47: #{tpu_custom_call.1} parent=1 // pred_check_branch
      %74 = sbr.rel (0) target = $region49
    $region48: #{tpu_custom_call.1} parent=1 // pred_region
      _
    $region49: #{tpu_custom_call.1} parent=1 // pred_fallthru
      _
    // Predicated region
    $region50: #{tpu_custom_call.1} parent=1 // pred_check
      _
    $region51: #{tpu_custom_call.1} parent=1 // pred_check_branch
      %76 = sbr.rel (0) target = $region53
    $region52: #{tpu_custom_call.1} parent=1 // pred_region
      _
    $region53: #{tpu_custom_call.1} parent=1 // pred_fallthru
      _
    // Predicated region
    $region54: #{tpu_custom_call.1} parent=1 // pred_check
      _
    $region55: #{tpu_custom_call.1} parent=1 // pred_check_branch
      %78 = sbr.rel (0) target = $region57
    $region56: #{tpu_custom_call.1} parent=1 // pred_region
      %79 = dma.done [#allocation3], 4096
    $region57: #{tpu_custom_call.1} parent=1 // pred_fallthru
      _
    // Predicated region
    $region58: #{tpu_custom_call.1} parent=1 // pred_check
      _
    $region59: #{tpu_custom_call.1} parent=1 // pred_check_branch
      %81 = sbr.rel (0) target = $region61
    $region60: #{tpu_custom_call.1} parent=1 // pred_region
      %82 = dma.done [#allocation6], 4096
    $region61: #{tpu_custom_call.1} parent=1 // pred_fallthru
      _
    // Predicated region
    $region62: #{tpu_custom_call.1} parent=1 // pred_check
      _
    $region63: #{tpu_custom_call.1} parent=1 // pred_check_branch
      %84 = sbr.rel (0) target = $region65
    $region64: #{tpu_custom_call.1} parent=1 // pred_region
      %85 = dma.done [#allocation6], 4096
    $region65: #{tpu_custom_call.1} parent=1 // pred_fallthru
      _
    %v86 = vlaneseq
    %v87 = vand.u32 %v86, 127
    %vm88 = vcmp.lt.s32.totalorder %v87, 32
    %v89 = vsel %vm88, 1, 0
    %v90 = vcvt.s32.f32 %v89
    %v91 = vld [vmem:[%s0] sm:$0xff]
    %v92 = vld [vmem:[%s0 + $0x8] sm:$0xff]
    %v93 = vand.u32 2147483647, %v91
    %vm94 = vcmp.le.f32.partialorder %v93, 0.7853982
    %vm95 = vcmp.lt.s32.totalorder %v91, 0
    %v96 = vand.u32 %v91, 2139095040
    %v97 = vshrl.u32 %v96, 23
    %v98 = vsub.s32 %v97, 127
    %v99 = vand.u32 2147483647, %v91
    %v100 = vand.u32 %v99, 8388607
    %v101 = vor.u32 %v100, 8388608
    %v102 = vsub.s32 0, %v101
    %v103 = vadd.s32 %v98, 1
    %vm104 = vcmp.gt.s32.totalorder %v103, 0
    %v105 = vsel %vm104, %v103, 0
    %v106 = vshrl.u32 %v105, 5
    %v107 = vand.u32 %v105, 31
    %v108 = vsub.s32 32, %v107
    %v109 = vshrl.u32 683565275, %v108
    %v110 = vshll.u32 683565275, %v107
    %v111 = vshrl.u32 2475754826, %v108
    %v112 = vor.u32 %v110, %v111
    %v113 = vshll.u32 2475754826, %v107
    %v114 = vshrl.u32 2131351028, %v108
    %v115 = vor.u32 %v113, %v114
    %v116 = vshll.u32 2131351028, %v107
    %v117 = vshrl.u32 2102212464, %v108
    %v118 = vor.u32 %v116, %v117
    %v119 = vshll.u32 2102212464, %v107
    %v120 = vshrl.u32 920167782, %v108
    %v121 = vor.u32 %v119, %v120
    %v122 = vshll.u32 920167782, %v107
    %v123 = vshrl.u32 1326507024, %v108
    %v124 = vor.u32 %v122, %v123
    %vm125 = vcmp.lt.s32.totalorder %v106, 1
    %vm126 = vcmp.lt.s32.totalorder %v106, 2
    %vm127 = vcmp.lt.s32.totalorder %v106, 3
    %vm128 = vcmp.lt.s32.totalorder %v106, 4
    %v129 = vsel %vm125, %v109, %v112
    %v130 = vsel %vm128, %v118, 2102212464
    %v131 = vsel %vm127, %v115, %v130
    %v132 = vsel %vm126, %v129, %v131
    %v133 = vsel %vm125, %v112, %v115
    %v134 = vsel %vm128, %v121, 920167782
    %v135 = vsel %vm127, %v118, %v134
    %v136 = vsel %vm126, %v133, %v135
    %v137 = vsel %vm125, %v115, %v118
    %v138 = vsel %vm128, %v124, 1326507024
    %v139 = vsel %vm127, %v121, %v138
    %v140 = vsel %vm126, %v137, %v139
    %v141 = vshll.u32 %v101, 8
    %v142 = vmul.u32.u64.compose %v141, %v140
    %v143 = vextract.low.u32 %v142
    %v144 = vextract.high.u32 %v142
    %v145 = vmul.u32.u64.compose %v141, %v136
    %v146 = vextract.low.u32 %v145
    %v147 = vextract.high.u32 %v145
    %v148 = vmul.u32 %v141, %v132
    %v149 = vadd.s32 %v144, %v146
    %vm150 = vc.u32 %v144, %v146
    %v151 = vadd.s32 %v147, 1
    %v152 = vsel %vm150, %v151, %v147
    %v153 = vadd.s32 %v148, %v152
    %v154 = vadd.s32 %v153, 536870912
    %v155 = vshrl.u32 %v154, 30
    %v156 = vshll.u32 %v155, 30
    %v157 = vsub.s32 %v153, %v156
    %vm158 = vcmp.lt.s32.totalorder %v157, 0
    %v159 = vsub.s32 0, %v157
    %v160 = vsel %vm158, %v159, %v157
    %v161 = vclz %v160
    %v162 = vsub.s32 %v161, 2
    %vm163 = vcmp.gt.s32.totalorder 0, %v162
    %v164 = vsel %vm163, 0, %v162
    %v165 = vsub.s32 32, %v164
    %v166 = vshll.u32 %v157, %v164
    %v167 = vshrl.u32 %v149, %v165
    %v168 = vor.u32 %v166, %v167
    %v169 = vsub.s32 4294967266, %v164
    %v170 = vadd.s32 %v169, 127
    %v171 = vshll.u32 %v170, 23
    %v172 = vor.u32 4788187, %v171
    %v173 = vand.u32 2147483647, %v172
    %v175 = vcvt.s32.f32 %v168
    %v176 = vmul.f32 %v175, %v173
    %v177 = vxor.u32 %v176, 2147483648
    %v178 = vsel %vm95, %v177, %v176
    %v179 = vsub.s32 4, %v155
    %v180 = vsel %vm95, %v179, %v155
    %v181 = vsel %vm94, %v91, %v178
    %v182 = vsel %vm94, 0, %v180
    %v183 = vcosq.f32.pop %v181
    %v184 = vsinq.f32.pop %v181
    %vm185 = vweird.f32 %v91
    %v186 = vadd.s32 %v182, 3
    %v187 = vand.u32 %v186, 3
    %vm188 = vcmp.lt.s32.totalorder %v187, 2
    %vm189 = vcmp.eq.s32.totalorder %v187, 0
    %v190 = vxor.u32 %v184, 2147483648
    %v191 = vsel %vm189, %v183, %v190
    %vm192 = vcmp.eq.s32.totalorder %v187, 2
    %v193 = vxor.u32 %v183, 2147483648
    %v194 = vsel %vm192, %v193, %v184
    %v195 = vsel %vm188, %v191, %v194
    %v196 = vsel %vm185, nan, %v195
    %v197 = vand.u32 2147483647, %v92
    %vm198 = vcmp.le.f32.partialorder %v197, 0.7853982
    %vm199 = vcmp.lt.s32.totalorder %v92, 0
    %v200 = vand.u32 %v92, 2139095040
    %v201 = vshrl.u32 %v200, 23
    %v202 = vsub.s32 %v201, 127
    %v203 = vand.u32 2147483647, %v92
    %v204 = vand.u32 %v203, 8388607
    %v205 = vor.u32 %v204, 8388608
    %v206 = vsub.s32 0, %v205
    %v207 = vadd.s32 %v202, 1
    %vm208 = vcmp.gt.s32.totalorder %v207, 0
    %v209 = vsel %vm208, %v207, 0
    %v210 = vshrl.u32 %v209, 5
    %v211 = vand.u32 %v209, 31
    %v212 = vsub.s32 32, %v211
    %v213 = vshrl.u32 683565275, %v212
    %v214 = vshll.u32 683565275, %v211
    %v215 = vshrl.u32 2475754826, %v212
    %v216 = vor.u32 %v214, %v215
    %v217 = vshll.u32 2475754826, %v211
    %v218 = vshrl.u32 2131351028, %v212
    %v219 = vor.u32 %v217, %v218
    %v220 = vshll.u32 2131351028, %v211
    %v221 = vshrl.u32 2102212464, %v212
    %v222 = vor.u32 %v220, %v221
    %v223 = vshll.u32 2102212464, %v211
    %v224 = vshrl.u32 920167782, %v212
    %v225 = vor.u32 %v223, %v224
    %v226 = vshll.u32 920167782, %v211
    %v227 = vshrl.u32 1326507024, %v212
    %v228 = vor.u32 %v226, %v227
    %vm229 = vcmp.lt.s32.totalorder %v210, 1
    %vm230 = vcmp.lt.s32.totalorder %v210, 2
    %vm231 = vcmp.lt.s32.totalorder %v210, 3
    %vm232 = vcmp.lt.s32.totalorder %v210, 4
    %v233 = vsel %vm229, %v213, %v216
    %v234 = vsel %vm232, %v222, 2102212464
    %v235 = vsel %vm231, %v219, %v234
    %v236 = vsel %vm230, %v233, %v235
    %v237 = vsel %vm229, %v216, %v219
    %v238 = vsel %vm232, %v225, 920167782
    %v239 = vsel %vm231, %v222, %v238
    %v240 = vsel %vm230, %v237, %v239
    %v241 = vsel %vm229, %v219, %v222
    %v242 = vsel %vm232, %v228, 1326507024
    %v243 = vsel %vm231, %v225, %v242
    %v244 = vsel %vm230, %v241, %v243
    %v245 = vshll.u32 %v205, 8
    %v246 = vmul.u32.u64.compose %v245, %v244
    %v247 = vextract.low.u32 %v246
    %v248 = vextract.high.u32 %v246
    %v249 = vmul.u32.u64.compose %v245, %v240
    %v250 = vextract.low.u32 %v249
    %v251 = vextract.high.u32 %v249
    %v252 = vmul.u32 %v245, %v236
    %v253 = vadd.s32 %v248, %v250
    %vm254 = vc.u32 %v248, %v250
    %v255 = vadd.s32 %v251, 1
    %v256 = vsel %vm254, %v255, %v251
    %v257 = vadd.s32 %v252, %v256
    %v258 = vadd.s32 %v257, 536870912
    %v259 = vshrl.u32 %v258, 30
    %v260 = vshll.u32 %v259, 30
    %v261 = vsub.s32 %v257, %v260
    %vm262 = vcmp.lt.s32.totalorder %v261, 0
    %v263 = vsub.s32 0, %v261
    %v264 = vsel %vm262, %v263, %v261
    %v265 = vclz %v264
    %v266 = vsub.s32 %v265, 2
    %vm267 = vcmp.gt.s32.totalorder 0, %v266
    %v268 = vsel %vm267, 0, %v266
    %v269 = vsub.s32 32, %v268
    %v270 = vshll.u32 %v261, %v268
    %v271 = vshrl.u32 %v253, %v269
    %v272 = vor.u32 %v270, %v271
    %v273 = vsub.s32 4294967266, %v268
    %v274 = vadd.s32 %v273, 127
    %v275 = vshll.u32 %v274, 23
    %v276 = vor.u32 4788187, %v275
    %v277 = vand.u32 2147483647, %v276
    %v279 = vcvt.s32.f32 %v272
    %v280 = vmul.f32 %v279, %v277
    %v281 = vxor.u32 %v280, 2147483648
    %v282 = vsel %vm199, %v281, %v280
    %v283 = vsub.s32 4, %v259
    %v284 = vsel %vm199, %v283, %v259
    %v285 = vsel %vm198, %v92, %v282
    %v286 = vsel %vm198, 0, %v284
    %v287 = vcosq.f32.pop %v285
    %v288 = vsinq.f32.pop %v285
    %vm289 = vweird.f32 %v92
    %v290 = vadd.s32 %v286, 3
    %v291 = vand.u32 %v290, 3
    %vm292 = vcmp.lt.s32.totalorder %v291, 2
    %vm293 = vcmp.eq.s32.totalorder %v291, 0
    %v294 = vxor.u32 %v288, 2147483648
    %v295 = vsel %vm293, %v287, %v294
    %vm296 = vcmp.eq.s32.totalorder %v291, 2
    %v297 = vxor.u32 %v287, 2147483648
    %v298 = vsel %vm296, %v297, %v288
    %v299 = vsel %vm292, %v295, %v298
    %v300 = vsel %vm289, nan, %v299
    %v301 = vand.u32 2147483647, %v91
    %vm302 = vcmp.le.f32.partialorder %v301, 0.7853982
    %vm303 = vcmp.lt.s32.totalorder %v91, 0
    %v304 = vand.u32 %v91, 2139095040
    %v305 = vshrl.u32 %v304, 23
    %v306 = vsub.s32 %v305, 127
    %v307 = vand.u32 2147483647, %v91
    %v308 = vand.u32 %v307, 8388607
    %v309 = vor.u32 %v308, 8388608
    %v310 = vsub.s32 0, %v309
    %v311 = vadd.s32 %v306, 1
    %vm312 = vcmp.gt.s32.totalorder %v311, 0
    %v313 = vsel %vm312, %v311, 0
    %v314 = vshrl.u32 %v313, 5
    %v315 = vand.u32 %v313, 31
    %v316 = vsub.s32 32, %v315
    %v317 = vshrl.u32 683565275, %v316
    %v318 = vshll.u32 683565275, %v315
    %v319 = vshrl.u32 2475754826, %v316
    %v320 = vor.u32 %v318, %v319
    %v321 = vshll.u32 2475754826, %v315
    %v322 = vshrl.u32 2131351028, %v316
    %v323 = vor.u32 %v321, %v322
    %v324 = vshll.u32 2131351028, %v315
    %v325 = vshrl.u32 2102212464, %v316
    %v326 = vor.u32 %v324, %v325
    %v327 = vshll.u32 2102212464, %v315
    %v328 = vshrl.u32 920167782, %v316
    %v329 = vor.u32 %v327, %v328
    %v330 = vshll.u32 920167782, %v315
    %v331 = vshrl.u32 1326507024, %v316
    %v332 = vor.u32 %v330, %v331
    %vm333 = vcmp.lt.s32.totalorder %v314, 1
    %vm334 = vcmp.lt.s32.totalorder %v314, 2
    %vm335 = vcmp.lt.s32.totalorder %v314, 3
    %vm336 = vcmp.lt.s32.totalorder %v314, 4
    %v337 = vsel %vm333, %v317, %v320
    %v338 = vsel %vm336, %v326, 2102212464
    %v339 = vsel %vm335, %v323, %v338
    %v340 = vsel %vm334, %v337, %v339
    %v341 = vsel %vm333, %v320, %v323
    %v342 = vsel %vm336, %v329, 920167782
    %v343 = vsel %vm335, %v326, %v342
    %v344 = vsel %vm334, %v341, %v343
    %v345 = vsel %vm333, %v323, %v326
    %v346 = vsel %vm336, %v332, 1326507024
    %v347 = vsel %vm335, %v329, %v346
    %v348 = vsel %vm334, %v345, %v347
    %v349 = vshll.u32 %v309, 8
    %v350 = vmul.u32.u64.compose %v349, %v348
    %v351 = vextract.low.u32 %v350
    %v352 = vextract.high.u32 %v350
    %v353 = vmul.u32.u64.compose %v349, %v344
    %v354 = vextract.low.u32 %v353
    %v355 = vextract.high.u32 %v353
    %v356 = vmul.u32 %v349, %v340
    %v357 = vadd.s32 %v352, %v354
    %vm358 = vc.u32 %v352, %v354
    %v359 = vadd.s32 %v355, 1
    %v360 = vsel %vm358, %v359, %v355
    %v361 = vadd.s32 %v356, %v360
    %v362 = vadd.s32 %v361, 536870912
    %v363 = vshrl.u32 %v362, 30
    %v364 = vshll.u32 %v363, 30
    %v365 = vsub.s32 %v361, %v364
    %vm366 = vcmp.lt.s32.totalorder %v365, 0
    %v367 = vsub.s32 0, %v365
    %v368 = vsel %vm366, %v367, %v365
    %v369 = vclz %v368
    %v370 = vsub.s32 %v369, 2
    %vm371 = vcmp.gt.s32.totalorder 0, %v370
    %v372 = vsel %vm371, 0, %v370
    %v373 = vsub.s32 32, %v372
    %v374 = vshll.u32 %v365, %v372
    %v375 = vshrl.u32 %v357, %v373
    %v376 = vor.u32 %v374, %v375
    %v377 = vsub.s32 4294967266, %v372
    %v378 = vadd.s32 %v377, 127
    %v379 = vshll.u32 %v378, 23
    %v380 = vor.u32 4788187, %v379
    %v381 = vand.u32 2147483647, %v380
    %v383 = vcvt.s32.f32 %v376
    %v384 = vmul.f32 %v383, %v381
    %v385 = vxor.u32 %v384, 2147483648
    %v386 = vsel %vm303, %v385, %v384
    %v387 = vsub.s32 4, %v363
    %v388 = vsel %vm303, %v387, %v363
    %v389 = vsel %vm302, %v91, %v386
    %v390 = vsel %vm302, 0, %v388
    %v391 = vcosq.f32.pop %v389
    %v392 = vsinq.f32.pop %v389
    %vm393 = vweird.f32 %v91
    %v394 = vand.u32 %v390, 3
    %vm395 = vcmp.lt.s32.totalorder %v394, 2
    %vm396 = vcmp.eq.s32.totalorder %v394, 0
    %v397 = vxor.u32 %v392, 2147483648
    %v398 = vsel %vm396, %v391, %v397
    %vm399 = vcmp.eq.s32.totalorder %v394, 2
    %v400 = vxor.u32 %v391, 2147483648
    %v401 = vsel %vm399, %v400, %v392
    %v402 = vsel %vm395, %v398, %v401
    %v403 = vsel %vm393, nan, %v402
    %v404 = vand.u32 2147483647, %v92
    %vm405 = vcmp.le.f32.partialorder %v404, 0.7853982
    %vm406 = vcmp.lt.s32.totalorder %v92, 0
    %v407 = vand.u32 %v92, 2139095040
    %v408 = vshrl.u32 %v407, 23
    %v409 = vsub.s32 %v408, 127
    %v410 = vand.u32 2147483647, %v92
    %v411 = vand.u32 %v410, 8388607
    %v412 = vor.u32 %v411, 8388608
    %v413 = vsub.s32 0, %v412
    %v414 = vadd.s32 %v409, 1
    %vm415 = vcmp.gt.s32.totalorder %v414, 0
    %v416 = vsel %vm415, %v414, 0
    %v417 = vshrl.u32 %v416, 5
    %v418 = vand.u32 %v416, 31
    %v419 = vsub.s32 32, %v418
    %v420 = vshrl.u32 683565275, %v419
    %v421 = vshll.u32 683565275, %v418
    %v422 = vshrl.u32 2475754826, %v419
    %v423 = vor.u32 %v421, %v422
    %v424 = vshll.u32 2475754826, %v418
    %v425 = vshrl.u32 2131351028, %v419
    %v426 = vor.u32 %v424, %v425
    %v427 = vshll.u32 2131351028, %v418
    %v428 = vshrl.u32 2102212464, %v419
    %v429 = vor.u32 %v427, %v428
    %v430 = vshll.u32 2102212464, %v418
    %v431 = vshrl.u32 920167782, %v419
    %v432 = vor.u32 %v430, %v431
    %v433 = vshll.u32 920167782, %v418
    %v434 = vshrl.u32 1326507024, %v419
    %v435 = vor.u32 %v433, %v434
    %vm436 = vcmp.lt.s32.totalorder %v417, 1
    %vm437 = vcmp.lt.s32.totalorder %v417, 2
    %vm438 = vcmp.lt.s32.totalorder %v417, 3
    %vm439 = vcmp.lt.s32.totalorder %v417, 4
    %v440 = vsel %vm436, %v420, %v423
    %v441 = vsel %vm439, %v429, 2102212464
    %v442 = vsel %vm438, %v426, %v441
    %v443 = vsel %vm437, %v440, %v442
    %v444 = vsel %vm436, %v423, %v426
    %v445 = vsel %vm439, %v432, 920167782
    %v446 = vsel %vm438, %v429, %v445
    %v447 = vsel %vm437, %v444, %v446
    %v448 = vsel %vm436, %v426, %v429
    %v449 = vsel %vm439, %v435, 1326507024
    %v450 = vsel %vm438, %v432, %v449
    %v451 = vsel %vm437, %v448, %v450
    %v452 = vshll.u32 %v412, 8
    %v453 = vmul.u32.u64.compose %v452, %v451
    %v454 = vextract.low.u32 %v453
    %v455 = vextract.high.u32 %v453
    %v456 = vmul.u32.u64.compose %v452, %v447
    %v457 = vextract.low.u32 %v456
    %v458 = vextract.high.u32 %v456
    %v459 = vmul.u32 %v452, %v443
    %v460 = vadd.s32 %v455, %v457
    %vm461 = vc.u32 %v455, %v457
    %v462 = vadd.s32 %v458, 1
    %v463 = vsel %vm461, %v462, %v458
    %v464 = vadd.s32 %v459, %v463
    %v465 = vadd.s32 %v464, 536870912
    %v466 = vshrl.u32 %v465, 30
    %v467 = vshll.u32 %v466, 30
    %v468 = vsub.s32 %v464, %v467
    %vm469 = vcmp.lt.s32.totalorder %v468, 0
    %v470 = vsub.s32 0, %v468
    %v471 = vsel %vm469, %v470, %v468
    %v472 = vclz %v471
    %v473 = vsub.s32 %v472, 2
    %vm474 = vcmp.gt.s32.totalorder 0, %v473
    %v475 = vsel %vm474, 0, %v473
    %v476 = vsub.s32 32, %v475
    %v477 = vshll.u32 %v468, %v475
    %v478 = vshrl.u32 %v460, %v476
    %v479 = vor.u32 %v477, %v478
    %v480 = vsub.s32 4294967266, %v475
    %v481 = vadd.s32 %v480, 127
    %v482 = vshll.u32 %v481, 23
    %v483 = vor.u32 4788187, %v482
    %v484 = vand.u32 2147483647, %v483
    %v486 = vcvt.s32.f32 %v479
    %v487 = vmul.f32 %v486, %v484
    %v488 = vxor.u32 %v487, 2147483648
    %v489 = vsel %vm406, %v488, %v487
    %v490 = vsub.s32 4, %v466
    %v491 = vsel %vm406, %v490, %v466
    %v492 = vsel %vm405, %v92, %v489
    %v493 = vsel %vm405, 0, %v491
    %v494 = vcosq.f32.pop %v492
    %v495 = vsinq.f32.pop %v492
    %vm496 = vweird.f32 %v92
    %v497 = vand.u32 %v493, 3
    %vm498 = vcmp.lt.s32.totalorder %v497, 2
    %vm499 = vcmp.eq.s32.totalorder %v497, 0
    %v500 = vxor.u32 %v495, 2147483648
    %v501 = vsel %vm499, %v494, %v500
    %vm502 = vcmp.eq.s32.totalorder %v497, 2
    %v503 = vxor.u32 %v494, 2147483648
    %v504 = vsel %vm502, %v503, %v495
    %v505 = vsel %vm498, %v501, %v504
    %v506 = vsel %vm496, nan, %v505
    %509 = vrot.lane.b32.xlu0 %v403, 127
    %v510 = vpop.permute.xlu0 %509
    %511 = vrot.lane.b32.xlu0 %v506, 127
    %v512 = vpop.permute.xlu0 %511
    %v515 = vmul.f32 %v403, %v510
    %v516 = vmul.f32 %v506, %v512
    %519 = vrot.lane.b32.xlu0 %v196, 127
    %v520 = vpop.permute.xlu0 %519
    %521 = vrot.lane.b32.xlu0 %v300, 127
    %v522 = vpop.permute.xlu0 %521
    %v525 = vmul.f32 %v403, %v520
    %v526 = vmul.f32 %v506, %v522
    %v527 = vld [vmem:[%s1] sm:$0xff]
    %v528 = vld [vmem:[%s1 + $0x8] sm:$0xff]
    %531 = vrot.lane.b32.xlu0 %v525, 1
    %v532 = vpop.permute.xlu0 %531
    %533 = vrot.lane.b32.xlu0 %v526, 1
    %v534 = vpop.permute.xlu0 %533
    %537 = vrot.lane.b32.xlu0 %v196, 2
    %v538 = vpop.permute.xlu0 %537
    %539 = vrot.lane.b32.xlu0 %v300, 2
    %v540 = vpop.permute.xlu0 %539
    %543 = vrot.lane.b32.xlu0 %v196, 1
    %v544 = vpop.permute.xlu0 %543
    %545 = vrot.lane.b32.xlu0 %v300, 1
    %v546 = vpop.permute.xlu0 %545
    %549 = vrot.lane.b32.xlu0 %v403, 4
    %v550 = vpop.permute.xlu0 %549
    %551 = vrot.lane.b32.xlu0 %v506, 4
    %v552 = vpop.permute.xlu0 %551
    %557 = vrot.lane.b32.xlu0 %v91, 4
    %v558 = vpop.permute.xlu0 %557
    %559 = vrot.lane.b32.xlu0 %v92, 4
    %v560 = vpop.permute.xlu0 %559
    %565 = vrot.lane.b32.xlu0 %v527, 12
    %v566 = vpop.permute.xlu0 %565
    %567 = vrot.lane.b32.xlu0 %v528, 12
    %v568 = vpop.permute.xlu0 %567
    %vm571 = vcmask 7168
    %v572 = vsel %vm571, %v515, %v532
    %v573 = vsel %vm571, %v516, %v534
    %vm574 = vcmask 15360
    %v575 = vsel %vm574, %v572, %v538
    %v576 = vsel %vm574, %v573, %v540
    %vm577 = vcmask 23552
    %v578 = vsel %vm577, %v575, %v544
    %v579 = vsel %vm577, %v576, %v546
    %vm580 = vcmask 48128
    %v581 = vsel %vm580, %v578, %v550
    %v582 = vsel %vm580, %v579, %v552
    %vm583 = vcmask 72704
    %v584 = vsel %vm583, %v581, %v558
    %v585 = vsel %vm583, %v582, %v560
    %vm586 = vcmask 97280
    %v587 = vsel %vm586, %v584, %v566
    %v588 = vsel %vm586, %v585, %v568
    %v589 = vld [vmem:[%s2] sm:$0xff]
    %v590 = vld [vmem:[%s2 + $0x8] sm:$0xff]
    %v591 = vld [vmem:[%s2 + $0x10] sm:$0x7]
    %vm592 = vcmask 154624
    %v594 = vsel %vm592, %v587, 0
    %v597 = vsel %vm592, %v588, 0
    %vm599 = vcmask 1042432
    %v601 = vsel %vm599, %v591, 0
    %603 = vmatprep.subr.mxu0 0.0
    %604 = vmatpush1.msra.mxu0 %v589
    %605 = vmatprep.subr.mxu0 0.0
    %606 = vmatpush1.msra.mxu0 %v590
    %607 = vmatprep.subr.mxu0 0.0
    %608 = vmatpush1.msra.mxu0 %v601
    %609 = vmatprep.subr.mxu0 0.0
    %610 = vmatpush1.msra.mxu0 0.0
    %611 = vmatprep.subr.mxu0 0.0
    %612 = vmatpush1.msra.mxu0 0.0
    %613 = vmatprep.subr.mxu0 0.0
    %614 = vmatpush1.msra.mxu0 0.0
    %615 = vmatprep.subr.mxu0 0.0
    %616 = vmatpush1.msra.mxu0 0.0
    %617 = vmatprep.subr.mxu0 0.0
    %618 = vmatpush1.msra.mxu0 0.0
    %619 = vmatprep.subr.mxu0 0.0
    %620 = vmatpush1.msra.mxu0 0.0
    %621 = vmatprep.subr.mxu0 0.0
    %622 = vmatpush1.msra.mxu0 0.0
    %623 = vmatprep.subr.mxu0 0.0
    %624 = vmatpush1.msra.mxu0 0.0
    %625 = vmatprep.subr.mxu0 0.0
    %626 = vmatpush1.msra.mxu0 0.0
    %627 = vmatprep.subr.mxu0 0.0
    %628 = vmatpush1.msra.mxu0 0.0
    %629 = vmatprep.subr.mxu0 0.0
    %630 = vmatpush1.msra.mxu0 0.0
    %631 = vmatprep.subr.mxu0 0.0
    %632 = vmatpush1.msra.mxu0 0.0
    %633 = vmatprep.subr.mxu0 0.0
    %634 = vmatpush1.msra.mxu0 0.0
    %635 = vmatprep.subr.mxu0 0.0
    %636 = vmatpush1.msra.mxu0 0.0
    %637 = vmatprep.subr.mxu0 0.0
    %638 = vmatpush1.msra.mxu0 0.0
    %639 = vmatprep.subr.mxu0 0.0
    %640 = vmatpush1.msra.mxu0 0.0
    %641 = vmatprep.subr.mxu0 0.0
    %642 = vmatpush1.msra.mxu0 0.0
    %643 = vmatprep.subr.mxu0 0.0
    %644 = vmatpush1.msra.mxu0 0.0
    %645 = vmatprep.subr.mxu0 0.0
    %646 = vmatpush1.msra.mxu0 0.0
    %647 = vmatprep.subr.mxu0 0.0
    %648 = vmatpush1.msra.mxu0 0.0
    %649 = vmatprep.subr.mxu0 0.0
    %650 = vmatpush1.msra.mxu0 0.0
    %651 = vmatprep.subr.mxu0 0.0
    %652 = vmatpush1.msra.mxu0 0.0
    %653 = vmatprep.subr.mxu0 0.0
    %654 = vmatpush1.msra.mxu0 0.0
    %655 = vmatprep.subr.mxu0 0.0
    %656 = vmatpush1.msra.mxu0 0.0
    %657 = vmatprep.subr.mxu0 0.0
    %658 = vmatpush1.msra.mxu0 0.0
    %659 = vmatprep.subr.mxu0 0.0
    %660 = vmatpush1.msra.mxu0 0.0
    %661 = vmatprep.subr.mxu0 0.0
    %662 = vmatpush1.msra.mxu0 0.0
    %663 = vmatprep.subr.mxu0 0.0
    %664 = vmatpush1.msra.mxu0 0.0
    %665 = vmatprep.subr.mxu0 0.0
    %666 = vmatpush1.msra.mxu0 0.0
    %667 = vmatprep.mubr.f32.mxu0 0.0
    %668 = vmatmul.mubr.f32.gmra.mrb[0].mxu0 %v594
    %v669 = vpop.f32.mrb[0].mxu0
    %v670 = vadd.f32 0.0, %v669
    %v671 = vpop.f32.mrb[0].mxu0
    %672 = vmatprep.mubr.f32.mxu0 0.0
    %673 = vmatmul.mubr.f32.gmra.mrb[0].mxu0 %v597
    %v674 = vpop.f32.mrb[0].mxu0
    %v675 = vadd.f32 0.0, %v674
    %v676 = vpop.f32.mrb[0].mxu0
    %677 = vdwg.mxu0
    %v678 = vld [vmem:[#allocation2] sm:$0xff]
    %v679 = vld [vmem:[#allocation2 + $0x8] sm:$0xff]
    %v680 = vld [vmem:[#allocation2 + $0x10] sm:$0xff]
    %v681 = vld [vmem:[#allocation2 + $0x18] sm:$0xff]
    %v682 = vld [vmem:[#allocation2 + $0x20] sm:$0xff]
    %v683 = vld [vmem:[#allocation2 + $0x28] sm:$0xff]
    %v684 = vld [vmem:[#allocation2 + $0x30] sm:$0xff]
    %v685 = vld [vmem:[#allocation2 + $0x38] sm:$0xff]
    %v686 = vld [vmem:[#allocation2 + $0x40] sm:$0xff]
    %v687 = vld [vmem:[#allocation2 + $0x48] sm:$0xff]
    %v688 = vld [vmem:[#allocation2 + $0x50] sm:$0xff]
    %v689 = vld [vmem:[#allocation2 + $0x58] sm:$0xff]
    %v690 = vld [vmem:[#allocation2 + $0x60] sm:$0xff]
    %v691 = vld [vmem:[#allocation2 + $0x68] sm:$0xff]
    %v692 = vld [vmem:[#allocation2 + $0x70] sm:$0xff]
    %v693 = vld [vmem:[#allocation2 + $0x78] sm:$0xff]
    %v694 = vld [vmem:[%s4] sm:$0x1]
    %v696 = vlaneseq
    %v697 = vshrl.u32 %v696, 7
    %v698 = vsub.s32 0, %v697
    %v699 = vrot.slane %v694, %v698
    %701 = vmatprep.subr.mxu0 0.0
    %702 = vmatpush1.msra.mxu0 %v678
    %703 = vmatprep.subr.mxu0 0.0
    %704 = vmatpush1.msra.mxu0 %v679
    %705 = vmatprep.subr.mxu0 0.0
    %706 = vmatpush1.msra.mxu0 %v680
    %707 = vmatprep.subr.mxu0 0.0
    %708 = vmatpush1.msra.mxu0 %v681
    %709 = vmatprep.subr.mxu0 0.0
    %710 = vmatpush1.msra.mxu0 %v682
    %711 = vmatprep.subr.mxu0 0.0
    %712 = vmatpush1.msra.mxu0 %v683
    %713 = vmatprep.subr.mxu0 0.0
    %714 = vmatpush1.msra.mxu0 %v684
    %715 = vmatprep.subr.mxu0 0.0
    %716 = vmatpush1.msra.mxu0 %v685
    %717 = vmatprep.subr.mxu0 0.0
    %718 = vmatpush1.msra.mxu0 %v686
    %719 = vmatprep.subr.mxu0 0.0
    %720 = vmatpush1.msra.mxu0 %v687
    %721 = vmatprep.subr.mxu0 0.0
    %722 = vmatpush1.msra.mxu0 %v688
    %723 = vmatprep.subr.mxu0 0.0
    %724 = vmatpush1.msra.mxu0 %v689
    %725 = vmatprep.subr.mxu0 0.0
    %726 = vmatpush1.msra.mxu0 %v690
    %727 = vmatprep.subr.mxu0 0.0
    %728 = vmatpush1.msra.mxu0 %v691
    %729 = vmatprep.subr.mxu0 0.0
    %730 = vmatpush1.msra.mxu0 %v692
    %731 = vmatprep.subr.mxu0 0.0
    %732 = vmatpush1.msra.mxu0 %v693
    %733 = vmatprep.subr.mxu0 0.0
    %734 = vmatpush1.msra.mxu0 0.0
    %735 = vmatprep.subr.mxu0 0.0
    %736 = vmatpush1.msra.mxu0 0.0
    %737 = vmatprep.subr.mxu0 0.0
    %738 = vmatpush1.msra.mxu0 0.0
    %739 = vmatprep.subr.mxu0 0.0
    %740 = vmatpush1.msra.mxu0 0.0
    %741 = vmatprep.subr.mxu0 0.0
    %742 = vmatpush1.msra.mxu0 0.0
    %743 = vmatprep.subr.mxu0 0.0
    %744 = vmatpush1.msra.mxu0 0.0
    %745 = vmatprep.subr.mxu0 0.0
    %746 = vmatpush1.msra.mxu0 0.0
    %747 = vmatprep.subr.mxu0 0.0
    %748 = vmatpush1.msra.mxu0 0.0
    %749 = vmatprep.subr.mxu0 0.0
    %750 = vmatpush1.msra.mxu0 0.0
    %751 = vmatprep.subr.mxu0 0.0
    %752 = vmatpush1.msra.mxu0 0.0
    %753 = vmatprep.subr.mxu0 0.0
    %754 = vmatpush1.msra.mxu0 0.0
    %755 = vmatprep.subr.mxu0 0.0
    %756 = vmatpush1.msra.mxu0 0.0
    %757 = vmatprep.subr.mxu0 0.0
    %758 = vmatpush1.msra.mxu0 0.0
    %759 = vmatprep.subr.mxu0 0.0
    %760 = vmatpush1.msra.mxu0 0.0
    %761 = vmatprep.subr.mxu0 0.0
    %762 = vmatpush1.msra.mxu0 0.0
    %763 = vmatprep.subr.mxu0 0.0
    %764 = vmatpush1.msra.mxu0 0.0
    %765 = vmatprep.mubr.f32.mxu0 0.0
    %766 = vmatmul.mubr.f32.gmra.mrb[0].mxu0 %v670
    %v767 = vpop.f32.mrb[0].mxu0
    %v768 = vadd.f32 %v699, %v767
    %v769 = vpop.f32.mrb[0].mxu0
    %770 = vmatprep.mubr.f32.mxu0 0.0
    %771 = vmatmul.mubr.f32.gmra.mrb[0].mxu0 %v675
    %v772 = vpop.f32.mrb[0].mxu0
    %v773 = vadd.f32 %v699, %v772
    %v774 = vpop.f32.mrb[0].mxu0
    %775 = vdwg.mxu0
    %v776 = vadd.f32 %v768, %v670
    %v777 = vadd.f32 %v773, %v675
    %v778 = vld [vmem:[%s5] sm:$0x1]
    %v779 = vld [vmem:[%s6] sm:$0x1]
    %780 = vadd.xlane.f32.xlu0 %v776
    %v781 = vpop.xlane.xlu0 %780
    %782 = vadd.xlane.f32.xlu0 %v777
    %v783 = vpop.xlane.xlu0 %782
    %v784 = vmul.f32 %v781, 0.03125
    %v785 = vmul.f32 %v783, 0.03125
    %v786 = vsub.f32 %v776, %v784
    %v787 = vsub.f32 %v777, %v785
    %v788 = vmul.f32 %v786, %v90
    %v789 = vmul.f32 %v787, %v90
    %v790 = vmul.f32 %v788, %v788
    %v791 = vmul.f32 %v789, %v789
    %792 = vadd.xlane.f32.xlu0 %v790
    %v793 = vpop.xlane.xlu0 %792
    %794 = vadd.xlane.f32.xlu0 %v791
    %v795 = vpop.xlane.xlu0 %794
    %v796 = vmul.f32 %v793, 0.03125
    %v797 = vmul.f32 %v795, 0.03125
    %v798 = vadd.f32 %v796, 1e-05
    %v799 = vadd.f32 %v797, 1e-05
    %v800 = vrsqrt.pop %v798
    %v801 = vrsqrt.pop %v799
    %v802 = vmul.f32 %v786, %v800
    %v803 = vmul.f32 %v787, %v801
    %v805 = vlaneseq
    %v806 = vshrl.u32 %v805, 7
    %v807 = vsub.s32 0, %v806
    %v808 = vrot.slane %v778, %v807
    %v810 = vmul.f32 %v808, %v802
    %v811 = vmul.f32 %v808, %v803
    %v813 = vlaneseq
    %v814 = vshrl.u32 %v813, 7
    %v815 = vsub.s32 0, %v814
    %v816 = vrot.slane %v779, %v815
    %v818 = vadd.f32 %v810, %v816
    %v819 = vadd.f32 %v811, %v816
    %v820 = vld [vmem:[#allocation5] sm:$0xff]
    %v821 = vld [vmem:[#allocation5 + $0x8] sm:$0xff]
    %v822 = vld [vmem:[#allocation5 + $0x10] sm:$0xff]
    %v823 = vld [vmem:[#allocation5 + $0x18] sm:$0xff]
    %v824 = vld [vmem:[#allocation5 + $0x20] sm:$0xff]
    %v825 = vld [vmem:[#allocation5 + $0x28] sm:$0xff]
    %v826 = vld [vmem:[#allocation5 + $0x30] sm:$0xff]
    %v827 = vld [vmem:[#allocation5 + $0x38] sm:$0xff]
    %v828 = vld [vmem:[#allocation5 + $0x40] sm:$0xff]
    %v829 = vld [vmem:[#allocation5 + $0x48] sm:$0xff]
    %v830 = vld [vmem:[#allocation5 + $0x50] sm:$0xff]
    %v831 = vld [vmem:[#allocation5 + $0x58] sm:$0xff]
    %v832 = vld [vmem:[#allocation5 + $0x60] sm:$0xff]
    %v833 = vld [vmem:[#allocation5 + $0x68] sm:$0xff]
    %v834 = vld [vmem:[#allocation5 + $0x70] sm:$0xff]
    %v835 = vld [vmem:[#allocation5 + $0x78] sm:$0xff]
    %v836 = vld [vmem:[%s8] sm:$0x1]
    %v838 = vlaneseq
    %v839 = vshrl.u32 %v838, 7
    %v840 = vsub.s32 0, %v839
    %v841 = vrot.slane %v836, %v840
    %843 = vmatprep.subr.mxu0 0.0
    %844 = vmatpush1.msra.mxu0 %v820
    %845 = vmatprep.subr.mxu0 0.0
    %846 = vmatpush1.msra.mxu0 %v821
    %847 = vmatprep.subr.mxu0 0.0
    %848 = vmatpush1.msra.mxu0 %v822
    %849 = vmatprep.subr.mxu0 0.0
    %850 = vmatpush1.msra.mxu0 %v823
    %851 = vmatprep.subr.mxu0 0.0
    %852 = vmatpush1.msra.mxu0 %v824
    %853 = vmatprep.subr.mxu0 0.0
    %854 = vmatpush1.msra.mxu0 %v825
    %855 = vmatprep.subr.mxu0 0.0
    %856 = vmatpush1.msra.mxu0 %v826
    %857 = vmatprep.subr.mxu0 0.0
    %858 = vmatpush1.msra.mxu0 %v827
    %859 = vmatprep.subr.mxu0 0.0
    %860 = vmatpush1.msra.mxu0 %v828
    %861 = vmatprep.subr.mxu0 0.0
    %862 = vmatpush1.msra.mxu0 %v829
    %863 = vmatprep.subr.mxu0 0.0
    %864 = vmatpush1.msra.mxu0 %v830
    %865 = vmatprep.subr.mxu0 0.0
    %866 = vmatpush1.msra.mxu0 %v831
    %867 = vmatprep.subr.mxu0 0.0
    %868 = vmatpush1.msra.mxu0 %v832
    %869 = vmatprep.subr.mxu0 0.0
    %870 = vmatpush1.msra.mxu0 %v833
    %871 = vmatprep.subr.mxu0 0.0
    %872 = vmatpush1.msra.mxu0 %v834
    %873 = vmatprep.subr.mxu0 0.0
    %874 = vmatpush1.msra.mxu0 %v835
    %875 = vmatprep.subr.mxu0 0.0
    %876 = vmatpush1.msra.mxu0 0.0
    %877 = vmatprep.subr.mxu0 0.0
    %878 = vmatpush1.msra.mxu0 0.0
    %879 = vmatprep.subr.mxu0 0.0
    %880 = vmatpush1.msra.mxu0 0.0
    %881 = vmatprep.subr.mxu0 0.0
    %882 = vmatpush1.msra.mxu0 0.0
    %883 = vmatprep.subr.mxu0 0.0
    %884 = vmatpush1.msra.mxu0 0.0
    %885 = vmatprep.subr.mxu0 0.0
    %886 = vmatpush1.msra.mxu0 0.0
    %887 = vmatprep.subr.mxu0 0.0
    %888 = vmatpush1.msra.mxu0 0.0
    %889 = vmatprep.subr.mxu0 0.0
    %890 = vmatpush1.msra.mxu0 0.0
    %891 = vmatprep.subr.mxu0 0.0
    %892 = vmatpush1.msra.mxu0 0.0
    %893 = vmatprep.subr.mxu0 0.0
    %894 = vmatpush1.msra.mxu0 0.0
    %895 = vmatprep.subr.mxu0 0.0
    %896 = vmatpush1.msra.mxu0 0.0
    %897 = vmatprep.subr.mxu0 0.0
    %898 = vmatpush1.msra.mxu0 0.0
    %899 = vmatprep.subr.mxu0 0.0
    %900 = vmatpush1.msra.mxu0 0.0
    %901 = vmatprep.subr.mxu0 0.0
    %902 = vmatpush1.msra.mxu0 0.0
    %903 = vmatprep.subr.mxu0 0.0
    %904 = vmatpush1.msra.mxu0 0.0
    %905 = vmatprep.subr.mxu0 0.0
    %906 = vmatpush1.msra.mxu0 0.0
    %907 = vmatprep.mubr.f32.mxu0 0.0
    %908 = vmatmul.mubr.f32.gmra.mrb[0].mxu0 %v818
    %v909 = vpop.f32.mrb[0].mxu0
    %v910 = vadd.f32 %v841, %v909
    %v911 = vpop.f32.mrb[0].mxu0
    %912 = vmatprep.mubr.f32.mxu0 0.0
    %913 = vmatmul.mubr.f32.gmra.mrb[0].mxu0 %v819
    %v914 = vpop.f32.mrb[0].mxu0
    %v915 = vadd.f32 %v841, %v914
    %v916 = vpop.f32.mrb[0].mxu0
    %917 = vdwg.mxu0
    %v918 = vmax.f32 %v910, 0.0
    %v919 = vmax.f32 %v915, 0.0
    %v920 = vld [vmem:[#allocation7] sm:$0xff]
    %v921 = vld [vmem:[#allocation7 + $0x8] sm:$0xff]
    %v922 = vld [vmem:[#allocation7 + $0x10] sm:$0xff]
    %v923 = vld [vmem:[#allocation7 + $0x18] sm:$0xff]
    %v924 = vld [vmem:[#allocation7 + $0x20] sm:$0xff]
    %v925 = vld [vmem:[#allocation7 + $0x28] sm:$0xff]
    %v926 = vld [vmem:[#allocation7 + $0x30] sm:$0xff]
    %v927 = vld [vmem:[#allocation7 + $0x38] sm:$0xff]
    %v928 = vld [vmem:[#allocation7 + $0x40] sm:$0xff]
    %v929 = vld [vmem:[#allocation7 + $0x48] sm:$0xff]
    %v930 = vld [vmem:[#allocation7 + $0x50] sm:$0xff]
    %v931 = vld [vmem:[#allocation7 + $0x58] sm:$0xff]
    %v932 = vld [vmem:[#allocation7 + $0x60] sm:$0xff]
    %v933 = vld [vmem:[#allocation7 + $0x68] sm:$0xff]
    %v934 = vld [vmem:[#allocation7 + $0x70] sm:$0xff]
    %v935 = vld [vmem:[#allocation7 + $0x78] sm:$0xff]
    %v936 = vld [vmem:[%s10] sm:$0x1]
    %v938 = vlaneseq
    %v939 = vshrl.u32 %v938, 7
    %v940 = vsub.s32 0, %v939
    %v941 = vrot.slane %v936, %v940
    %943 = vmatprep.subr.mxu0 0.0
    %944 = vmatpush1.msra.mxu0 %v920
    %945 = vmatprep.subr.mxu0 0.0
    %946 = vmatpush1.msra.mxu0 %v921
    %947 = vmatprep.subr.mxu0 0.0
    %948 = vmatpush1.msra.mxu0 %v922
    %949 = vmatprep.subr.mxu0 0.0
    %950 = vmatpush1.msra.mxu0 %v923
    %951 = vmatprep.subr.mxu0 0.0
    %952 = vmatpush1.msra.mxu0 %v924
    %953 = vmatprep.subr.mxu0 0.0
    %954 = vmatpush1.msra.mxu0 %v925
    %955 = vmatprep.subr.mxu0 0.0
    %956 = vmatpush1.msra.mxu0 %v926
    %957 = vmatprep.subr.mxu0 0.0
    %958 = vmatpush1.msra.mxu0 %v927
    %959 = vmatprep.subr.mxu0 0.0
    %960 = vmatpush1.msra.mxu0 %v928
    %961 = vmatprep.subr.mxu0 0.0
    %962 = vmatpush1.msra.mxu0 %v929
    %963 = vmatprep.subr.mxu0 0.0
    %964 = vmatpush1.msra.mxu0 %v930
    %965 = vmatprep.subr.mxu0 0.0
    %966 = vmatpush1.msra.mxu0 %v931
    %967 = vmatprep.subr.mxu0 0.0
    %968 = vmatpush1.msra.mxu0 %v932
    %969 = vmatprep.subr.mxu0 0.0
    %970 = vmatpush1.msra.mxu0 %v933
    %971 = vmatprep.subr.mxu0 0.0
    %972 = vmatpush1.msra.mxu0 %v934
    %973 = vmatprep.subr.mxu0 0.0
    %974 = vmatpush1.msra.mxu0 %v935
    %975 = vmatprep.subr.mxu0 0.0
    %976 = vmatpush1.msra.mxu0 0.0
    %977 = vmatprep.subr.mxu0 0.0
    %978 = vmatpush1.msra.mxu0 0.0
    %979 = vmatprep.subr.mxu0 0.0
    %980 = vmatpush1.msra.mxu0 0.0
    %981 = vmatprep.subr.mxu0 0.0
    %982 = vmatpush1.msra.mxu0 0.0
    %983 = vmatprep.subr.mxu0 0.0
    %984 = vmatpush1.msra.mxu0 0.0
    %985 = vmatprep.subr.mxu0 0.0
    %986 = vmatpush1.msra.mxu0 0.0
    %987 = vmatprep.subr.mxu0 0.0
    %988 = vmatpush1.msra.mxu0 0.0
    %989 = vmatprep.subr.mxu0 0.0
    %990 = vmatpush1.msra.mxu0 0.0
    %991 = vmatprep.subr.mxu0 0.0
    %992 = vmatpush1.msra.mxu0 0.0
    %993 = vmatprep.subr.mxu0 0.0
    %994 = vmatpush1.msra.mxu0 0.0
    %995 = vmatprep.subr.mxu0 0.0
    %996 = vmatpush1.msra.mxu0 0.0
    %997 = vmatprep.subr.mxu0 0.0
    %998 = vmatpush1.msra.mxu0 0.0
    %999 = vmatprep.subr.mxu0 0.0
    %1000 = vmatpush1.msra.mxu0 0.0
    %1001 = vmatprep.subr.mxu0 0.0
    %1002 = vmatpush1.msra.mxu0 0.0
    %1003 = vmatprep.subr.mxu0 0.0
    %1004 = vmatpush1.msra.mxu0 0.0
    %1005 = vmatprep.subr.mxu0 0.0
    %1006 = vmatpush1.msra.mxu0 0.0
    %1007 = vmatprep.mubr.f32.mxu0 0.0
    %1008 = vmatmul.mubr.f32.gmra.mrb[0].mxu0 %v918
    %v1009 = vpop.f32.mrb[0].mxu0
    %v1010 = vadd.f32 %v941, %v1009
    %v1011 = vpop.f32.mrb[0].mxu0
    %1012 = vmatprep.mubr.f32.mxu0 0.0
    %1013 = vmatmul.mubr.f32.gmra.mrb[0].mxu0 %v919
    %v1014 = vpop.f32.mrb[0].mxu0
    %v1015 = vadd.f32 %v941, %v1014
    %v1016 = vpop.f32.mrb[0].mxu0
    %1017 = vdwg.mxu0
    %v1018 = vadd.f32 %v1010, %v818
    %v1019 = vadd.f32 %v1015, %v819
    %v1020 = vld [vmem:[%s11] sm:$0x1]
    %v1021 = vld [vmem:[%s12] sm:$0x1]
    %1022 = vadd.xlane.f32.xlu0 %v1018
    %v1023 = vpop.xlane.xlu0 %1022
    %1024 = vadd.xlane.f32.xlu0 %v1019
    %v1025 = vpop.xlane.xlu0 %1024
    %v1026 = vmul.f32 %v1023, 0.03125
    %v1027 = vmul.f32 %v1025, 0.03125
    %v1028 = vsub.f32 %v1018, %v1026
    %v1029 = vsub.f32 %v1019, %v1027
    %v1030 = vmul.f32 %v1028, %v90
    %v1031 = vmul.f32 %v1029, %v90
    %v1032 = vmul.f32 %v1030, %v1030
    %v1033 = vmul.f32 %v1031, %v1031
    %1034 = vadd.xlane.f32.xlu0 %v1032
    %v1035 = vpop.xlane.xlu0 %1034
    %1036 = vadd.xlane.f32.xlu0 %v1033
    %v1037 = vpop.xlane.xlu0 %1036
    %v1038 = vmul.f32 %v1035, 0.03125
    %v1039 = vmul.f32 %v1037, 0.03125
    %v1040 = vadd.f32 %v1038, 1e-05
    %v1041 = vadd.f32 %v1039, 1e-05
    %v1042 = vrsqrt.pop %v1040
    %v1043 = vrsqrt.pop %v1041
    %v1044 = vmul.f32 %v1028, %v1042
    %v1045 = vmul.f32 %v1029, %v1043
    %v1047 = vlaneseq
    %v1048 = vshrl.u32 %v1047, 7
    %v1049 = vsub.s32 0, %v1048
    %v1050 = vrot.slane %v1020, %v1049
    %v1052 = vmul.f32 %v1050, %v1044
    %v1053 = vmul.f32 %v1050, %v1045
    %v1055 = vlaneseq
    %v1056 = vshrl.u32 %v1055, 7
    %v1057 = vsub.s32 0, %v1056
    %v1058 = vrot.slane %v1021, %v1057
    %v1060 = vadd.f32 %v1052, %v1058
    %v1061 = vadd.f32 %v1053, %v1058
    %s1062 = scalar_lea.vmem [#allocation2], 128
    %v1063 = vld [vmem:[%s1062] sm:$0xff]
    %v1064 = vld [vmem:[%s1062 + $0x8] sm:$0xff]
    %v1065 = vld [vmem:[%s1062 + $0x10] sm:$0xff]
    %v1066 = vld [vmem:[%s1062 + $0x18] sm:$0xff]
    %v1067 = vld [vmem:[%s1062 + $0x20] sm:$0xff]
    %v1068 = vld [vmem:[%s1062 + $0x28] sm:$0xff]
    %v1069 = vld [vmem:[%s1062 + $0x30] sm:$0xff]
    %v1070 = vld [vmem:[%s1062 + $0x38] sm:$0xff]
    %v1071 = vld [vmem:[%s1062 + $0x40] sm:$0xff]
    %v1072 = vld [vmem:[%s1062 + $0x48] sm:$0xff]
    %v1073 = vld [vmem:[%s1062 + $0x50] sm:$0xff]
    %v1074 = vld [vmem:[%s1062 + $0x58] sm:$0xff]
    %v1075 = vld [vmem:[%s1062 + $0x60] sm:$0xff]
    %v1076 = vld [vmem:[%s1062 + $0x68] sm:$0xff]
    %v1077 = vld [vmem:[%s1062 + $0x70] sm:$0xff]
    %v1078 = vld [vmem:[%s1062 + $0x78] sm:$0xff]
    %s1079 = scalar_lea.vmem %s4, 1
    %v1080 = vld [vmem:[%s1079] sm:$0x1]
    %v1082 = vlaneseq
    %v1083 = vshrl.u32 %v1082, 7
    %v1084 = vsub.s32 0, %v1083
    %v1085 = vrot.slane %v1080, %v1084
    %1087 = vmatprep.subr.mxu0 0.0
    %1088 = vmatpush1.msra.mxu0 %v1063
    %1089 = vmatprep.subr.mxu0 0.0
    %1090 = vmatpush1.msra.mxu0 %v1064
    %1091 = vmatprep.subr.mxu0 0.0
    %1092 = vmatpush1.msra.mxu0 %v1065
    %1093 = vmatprep.subr.mxu0 0.0
    %1094 = vmatpush1.msra.mxu0 %v1066
    %1095 = vmatprep.subr.mxu0 0.0
    %1096 = vmatpush1.msra.mxu0 %v1067
    %1097 = vmatprep.subr.mxu0 0.0
    %1098 = vmatpush1.msra.mxu0 %v1068
    %1099 = vmatprep.subr.mxu0 0.0
    %1100 = vmatpush1.msra.mxu0 %v1069
    %1101 = vmatprep.subr.mxu0 0.0
    %1102 = vmatpush1.msra.mxu0 %v1070
    %1103 = vmatprep.subr.mxu0 0.0
    %1104 = vmatpush1.msra.mxu0 %v1071
    %1105 = vmatprep.subr.mxu0 0.0
    %1106 = vmatpush1.msra.mxu0 %v1072
    %1107 = vmatprep.subr.mxu0 0.0
    %1108 = vmatpush1.msra.mxu0 %v1073
    %1109 = vmatprep.subr.mxu0 0.0
    %1110 = vmatpush1.msra.mxu0 %v1074
    %1111 = vmatprep.subr.mxu0 0.0
    %1112 = vmatpush1.msra.mxu0 %v1075
    %1113 = vmatprep.subr.mxu0 0.0
    %1114 = vmatpush1.msra.mxu0 %v1076
    %1115 = vmatprep.subr.mxu0 0.0
    %1116 = vmatpush1.msra.mxu0 %v1077
    %1117 = vmatprep.subr.mxu0 0.0
    %1118 = vmatpush1.msra.mxu0 %v1078
    %1119 = vmatprep.subr.mxu0 0.0
    %1120 = vmatpush1.msra.mxu0 0.0
    %1121 = vmatprep.subr.mxu0 0.0
    %1122 = vmatpush1.msra.mxu0 0.0
    %1123 = vmatprep.subr.mxu0 0.0
    %1124 = vmatpush1.msra.mxu0 0.0
    %1125 = vmatprep.subr.mxu0 0.0
    %1126 = vmatpush1.msra.mxu0 0.0
    %1127 = vmatprep.subr.mxu0 0.0
    %1128 = vmatpush1.msra.mxu0 0.0
    %1129 = vmatprep.subr.mxu0 0.0
    %1130 = vmatpush1.msra.mxu0 0.0
    %1131 = vmatprep.subr.mxu0 0.0
    %1132 = vmatpush1.msra.mxu0 0.0
    %1133 = vmatprep.subr.mxu0 0.0
    %1134 = vmatpush1.msra.mxu0 0.0
    %1135 = vmatprep.subr.mxu0 0.0
    %1136 = vmatpush1.msra.mxu0 0.0
    %1137 = vmatprep.subr.mxu0 0.0
    %1138 = vmatpush1.msra.mxu0 0.0
    %1139 = vmatprep.subr.mxu0 0.0
    %1140 = vmatpush1.msra.mxu0 0.0
    %1141 = vmatprep.subr.mxu0 0.0
    %1142 = vmatpush1.msra.mxu0 0.0
    %1143 = vmatprep.subr.mxu0 0.0
    %1144 = vmatpush1.msra.mxu0 0.0
    %1145 = vmatprep.subr.mxu0 0.0
    %1146 = vmatpush1.msra.mxu0 0.0
    %1147 = vmatprep.subr.mxu0 0.0
    %1148 = vmatpush1.msra.mxu0 0.0
    %1149 = vmatprep.subr.mxu0 0.0
    %1150 = vmatpush1.msra.mxu0 0.0
    %1151 = vmatprep.mubr.f32.mxu0 0.0
    %1152 = vmatmul.mubr.f32.gmra.mrb[0].mxu0 %v1060
    %v1153 = vpop.f32.mrb[0].mxu0
    %v1154 = vadd.f32 %v1085, %v1153
    %v1155 = vpop.f32.mrb[0].mxu0
    %1156 = vmatprep.mubr.f32.mxu0 0.0
    %1157 = vmatmul.mubr.f32.gmra.mrb[0].mxu0 %v1061
    %v1158 = vpop.f32.mrb[0].mxu0
    %v1159 = vadd.f32 %v1085, %v1158
    %v1160 = vpop.f32.mrb[0].mxu0
    %1161 = vdwg.mxu0
    %v1162 = vadd.f32 %v1154, %v1060
    %v1163 = vadd.f32 %v1159, %v1061
    %s1164 = scalar_lea.vmem %s5, 1
    %v1165 = vld [vmem:[%s1164] sm:$0x1]
    %s1166 = scalar_lea.vmem %s6, 1
    %v1167 = vld [vmem:[%s1166] sm:$0x1]
    %1168 = vadd.xlane.f32.xlu0 %v1162
    %v1169 = vpop.xlane.xlu0 %1168
    %1170 = vadd.xlane.f32.xlu0 %v1163
    %v1171 = vpop.xlane.xlu0 %1170
    %v1172 = vmul.f32 %v1169, 0.03125
    %v1173 = vmul.f32 %v1171, 0.03125
    %v1174 = vsub.f32 %v1162, %v1172
    %v1175 = vsub.f32 %v1163, %v1173
    %v1176 = vmul.f32 %v1174, %v90
    %v1177 = vmul.f32 %v1175, %v90
    %v1178 = vmul.f32 %v1176, %v1176
    %v1179 = vmul.f32 %v1177, %v1177
    %1180 = vadd.xlane.f32.xlu0 %v1178
    %v1181 = vpop.xlane.xlu0 %1180
    %1182 = vadd.xlane.f32.xlu0 %v1179
    %v1183 = vpop.xlane.xlu0 %1182
    %v1184 = vmul.f32 %v1181, 0.03125
    %v1185 = vmul.f32 %v1183, 0.03125
    %v1186 = vadd.f32 %v1184, 1e-05
    %v1187 = vadd.f32 %v1185, 1e-05
    %v1188 = vrsqrt.pop %v1186
    %v1189 = vrsqrt.pop %v1187
    %v1190 = vmul.f32 %v1174, %v1188
    %v1191 = vmul.f32 %v1175, %v1189
    %v1193 = vlaneseq
    %v1194 = vshrl.u32 %v1193, 7
    %v1195 = vsub.s32 0, %v1194
    %v1196 = vrot.slane %v1165, %v1195
    %v1198 = vmul.f32 %v1196, %v1190
    %v1199 = vmul.f32 %v1196, %v1191
    %v1201 = vlaneseq
    %v1202 = vshrl.u32 %v1201, 7
    %v1203 = vsub.s32 0, %v1202
    %v1204 = vrot.slane %v1167, %v1203
    %v1206 = vadd.f32 %v1198, %v1204
    %v1207 = vadd.f32 %v1199, %v1204
    %s1208 = scalar_lea.vmem [#allocation5], 128
    %v1209 = vld [vmem:[%s1208] sm:$0xff]
    %v1210 = vld [vmem:[%s1208 + $0x8] sm:$0xff]
    %v1211 = vld [vmem:[%s1208 + $0x10] sm:$0xff]
    %v1212 = vld [vmem:[%s1208 + $0x18] sm:$0xff]
    %v1213 = vld [vmem:[%s1208 + $0x20] sm:$0xff]
    %v1214 = vld [vmem:[%s1208 + $0x28] sm:$0xff]
    %v1215 = vld [vmem:[%s1208 + $0x30] sm:$0xff]
    %v1216 = vld [vmem:[%s1208 + $0x38] sm:$0xff]
    %v1217 = vld [vmem:[%s1208 + $0x40] sm:$0xff]
    %v1218 = vld [vmem:[%s1208 + $0x48] sm:$0xff]
    %v1219 = vld [vmem:[%s1208 + $0x50] sm:$0xff]
    %v1220 = vld [vmem:[%s1208 + $0x58] sm:$0xff]
    %v1221 = vld [vmem:[%s1208 + $0x60] sm:$0xff]
    %v1222 = vld [vmem:[%s1208 + $0x68] sm:$0xff]
    %v1223 = vld [vmem:[%s1208 + $0x70] sm:$0xff]
    %v1224 = vld [vmem:[%s1208 + $0x78] sm:$0xff]
    %s1225 = scalar_lea.vmem %s8, 1
    %v1226 = vld [vmem:[%s1225] sm:$0x1]
    %v1228 = vlaneseq
    %v1229 = vshrl.u32 %v1228, 7
    %v1230 = vsub.s32 0, %v1229
    %v1231 = vrot.slane %v1226, %v1230
    %1233 = vmatprep.subr.mxu0 0.0
    %1234 = vmatpush1.msra.mxu0 %v1209
    %1235 = vmatprep.subr.mxu0 0.0
    %1236 = vmatpush1.msra.mxu0 %v1210
    %1237 = vmatprep.subr.mxu0 0.0
    %1238 = vmatpush1.msra.mxu0 %v1211
    %1239 = vmatprep.subr.mxu0 0.0
    %1240 = vmatpush1.msra.mxu0 %v1212
    %1241 = vmatprep.subr.mxu0 0.0
    %1242 = vmatpush1.msra.mxu0 %v1213
    %1243 = vmatprep.subr.mxu0 0.0
    %1244 = vmatpush1.msra.mxu0 %v1214
    %1245 = vmatprep.subr.mxu0 0.0
    %1246 = vmatpush1.msra.mxu0 %v1215
    %1247 = vmatprep.subr.mxu0 0.0
    %1248 = vmatpush1.msra.mxu0 %v1216
    %1249 = vmatprep.subr.mxu0 0.0
    %1250 = vmatpush1.msra.mxu0 %v1217
    %1251 = vmatprep.subr.mxu0 0.0
    %1252 = vmatpush1.msra.mxu0 %v1218
    %1253 = vmatprep.subr.mxu0 0.0
    %1254 = vmatpush1.msra.mxu0 %v1219
    %1255 = vmatprep.subr.mxu0 0.0
    %1256 = vmatpush1.msra.mxu0 %v1220
    %1257 = vmatprep.subr.mxu0 0.0
    %1258 = vmatpush1.msra.mxu0 %v1221
    %1259 = vmatprep.subr.mxu0 0.0
    %1260 = vmatpush1.msra.mxu0 %v1222
    %1261 = vmatprep.subr.mxu0 0.0
    %1262 = vmatpush1.msra.mxu0 %v1223
    %1263 = vmatprep.subr.mxu0 0.0
    %1264 = vmatpush1.msra.mxu0 %v1224
    %1265 = vmatprep.subr.mxu0 0.0
    %1266 = vmatpush1.msra.mxu0 0.0
    %1267 = vmatprep.subr.mxu0 0.0
    %1268 = vmatpush1.msra.mxu0 0.0
    %1269 = vmatprep.subr.mxu0 0.0
    %1270 = vmatpush1.msra.mxu0 0.0
    %1271 = vmatprep.subr.mxu0 0.0
    %1272 = vmatpush1.msra.mxu0 0.0
    %1273 = vmatprep.subr.mxu0 0.0
    %1274 = vmatpush1.msra.mxu0 0.0
    %1275 = vmatprep.subr.mxu0 0.0
    %1276 = vmatpush1.msra.mxu0 0.0
    %1277 = vmatprep.subr.mxu0 0.0
    %1278 = vmatpush1.msra.mxu0 0.0
    %1279 = vmatprep.subr.mxu0 0.0
    %1280 = vmatpush1.msra.mxu0 0.0
    %1281 = vmatprep.subr.mxu0 0.0
    %1282 = vmatpush1.msra.mxu0 0.0
    %1283 = vmatprep.subr.mxu0 0.0
    %1284 = vmatpush1.msra.mxu0 0.0
    %1285 = vmatprep.subr.mxu0 0.0
    %1286 = vmatpush1.msra.mxu0 0.0
    %1287 = vmatprep.subr.mxu0 0.0
    %1288 = vmatpush1.msra.mxu0 0.0
    %1289 = vmatprep.subr.mxu0 0.0
    %1290 = vmatpush1.msra.mxu0 0.0
    %1291 = vmatprep.subr.mxu0 0.0
    %1292 = vmatpush1.msra.mxu0 0.0
    %1293 = vmatprep.subr.mxu0 0.0
    %1294 = vmatpush1.msra.mxu0 0.0
    %1295 = vmatprep.subr.mxu0 0.0
    %1296 = vmatpush1.msra.mxu0 0.0
    %1297 = vmatprep.mubr.f32.mxu0 0.0
    %1298 = vmatmul.mubr.f32.gmra.mrb[0].mxu0 %v1206
    %v1299 = vpop.f32.mrb[0].mxu0
    %v1300 = vadd.f32 %v1231, %v1299
    %v1301 = vpop.f32.mrb[0].mxu0
    %1302 = vmatprep.mubr.f32.mxu0 0.0
    %1303 = vmatmul.mubr.f32.gmra.mrb[0].mxu0 %v1207
    %v1304 = vpop.f32.mrb[0].mxu0
    %v1305 = vadd.f32 %v1231, %v1304
    %v1306 = vpop.f32.mrb[0].mxu0
    %1307 = vdwg.mxu0
    %v1308 = vmax.f32 %v1300, 0.0
    %v1309 = vmax.f32 %v1305, 0.0
    %s1310 = scalar_lea.vmem [#allocation7], 128
    %v1311 = vld [vmem:[%s1310] sm:$0xff]
    %v1312 = vld [vmem:[%s1310 + $0x8] sm:$0xff]
    %v1313 = vld [vmem:[%s1310 + $0x10] sm:$0xff]
    %v1314 = vld [vmem:[%s1310 + $0x18] sm:$0xff]
    %v1315 = vld [vmem:[%s1310 + $0x20] sm:$0xff]
    %v1316 = vld [vmem:[%s1310 + $0x28] sm:$0xff]
    %v1317 = vld [vmem:[%s1310 + $0x30] sm:$0xff]
    %v1318 = vld [vmem:[%s1310 + $0x38] sm:$0xff]
    %v1319 = vld [vmem:[%s1310 + $0x40] sm:$0xff]
    %v1320 = vld [vmem:[%s1310 + $0x48] sm:$0xff]
    %v1321 = vld [vmem:[%s1310 + $0x50] sm:$0xff]
    %v1322 = vld [vmem:[%s1310 + $0x58] sm:$0xff]
    %v1323 = vld [vmem:[%s1310 + $0x60] sm:$0xff]
    %v1324 = vld [vmem:[%s1310 + $0x68] sm:$0xff]
    %v1325 = vld [vmem:[%s1310 + $0x70] sm:$0xff]
    %v1326 = vld [vmem:[%s1310 + $0x78] sm:$0xff]
    %s1327 = scalar_lea.vmem %s10, 1
    %v1328 = vld [vmem:[%s1327] sm:$0x1]
    %v1330 = vlaneseq
    %v1331 = vshrl.u32 %v1330, 7
    %v1332 = vsub.s32 0, %v1331
    %v1333 = vrot.slane %v1328, %v1332
    %1335 = vmatprep.subr.mxu0 0.0
    %1336 = vmatpush1.msra.mxu0 %v1311
    %1337 = vmatprep.subr.mxu0 0.0
    %1338 = vmatpush1.msra.mxu0 %v1312
    %1339 = vmatprep.subr.mxu0 0.0
    %1340 = vmatpush1.msra.mxu0 %v1313
    %1341 = vmatprep.subr.mxu0 0.0
    %1342 = vmatpush1.msra.mxu0 %v1314
    %1343 = vmatprep.subr.mxu0 0.0
    %1344 = vmatpush1.msra.mxu0 %v1315
    %1345 = vmatprep.subr.mxu0 0.0
    %1346 = vmatpush1.msra.mxu0 %v1316
    %1347 = vmatprep.subr.mxu0 0.0
    %1348 = vmatpush1.msra.mxu0 %v1317
    %1349 = vmatprep.subr.mxu0 0.0
    %1350 = vmatpush1.msra.mxu0 %v1318
    %1351 = vmatprep.subr.mxu0 0.0
    %1352 = vmatpush1.msra.mxu0 %v1319
    %1353 = vmatprep.subr.mxu0 0.0
    %1354 = vmatpush1.msra.mxu0 %v1320
    %1355 = vmatprep.subr.mxu0 0.0
    %1356 = vmatpush1.msra.mxu0 %v1321
    %1357 = vmatprep.subr.mxu0 0.0
    %1358 = vmatpush1.msra.mxu0 %v1322
    %1359 = vmatprep.subr.mxu0 0.0
    %1360 = vmatpush1.msra.mxu0 %v1323
    %1361 = vmatprep.subr.mxu0 0.0
    %1362 = vmatpush1.msra.mxu0 %v1324
    %1363 = vmatprep.subr.mxu0 0.0
    %1364 = vmatpush1.msra.mxu0 %v1325
    %1365 = vmatprep.subr.mxu0 0.0
    %1366 = vmatpush1.msra.mxu0 %v1326
    %1367 = vmatprep.subr.mxu0 0.0
    %1368 = vmatpush1.msra.mxu0 0.0
    %1369 = vmatprep.subr.mxu0 0.0
    %1370 = vmatpush1.msra.mxu0 0.0
    %1371 = vmatprep.subr.mxu0 0.0
    %1372 = vmatpush1.msra.mxu0 0.0
    %1373 = vmatprep.subr.mxu0 0.0
    %1374 = vmatpush1.msra.mxu0 0.0
    %1375 = vmatprep.subr.mxu0 0.0
    %1376 = vmatpush1.msra.mxu0 0.0
    %1377 = vmatprep.subr.mxu0 0.0
    %1378 = vmatpush1.msra.mxu0 0.0
    %1379 = vmatprep.subr.mxu0 0.0
    %1380 = vmatpush1.msra.mxu0 0.0
    %1381 = vmatprep.subr.mxu0 0.0
    %1382 = vmatpush1.msra.mxu0 0.0
    %1383 = vmatprep.subr.mxu0 0.0
    %1384 = vmatpush1.msra.mxu0 0.0
    %1385 = vmatprep.subr.mxu0 0.0
    %1386 = vmatpush1.msra.mxu0 0.0
    %1387 = vmatprep.subr.mxu0 0.0
    %1388 = vmatpush1.msra.mxu0 0.0
    %1389 = vmatprep.subr.mxu0 0.0
    %1390 = vmatpush1.msra.mxu0 0.0
    %1391 = vmatprep.subr.mxu0 0.0
    %1392 = vmatpush1.msra.mxu0 0.0
    %1393 = vmatprep.subr.mxu0 0.0
    %1394 = vmatpush1.msra.mxu0 0.0
    %1395 = vmatprep.subr.mxu0 0.0
    %1396 = vmatpush1.msra.mxu0 0.0
    %1397 = vmatprep.subr.mxu0 0.0
    %1398 = vmatpush1.msra.mxu0 0.0
    %1399 = vmatprep.mubr.f32.mxu0 0.0
    %1400 = vmatmul.mubr.f32.gmra.mrb[0].mxu0 %v1308
    %v1401 = vpop.f32.mrb[0].mxu0
    %v1402 = vadd.f32 %v1333, %v1401
    %v1403 = vpop.f32.mrb[0].mxu0
    %1404 = vmatprep.mubr.f32.mxu0 0.0
    %1405 = vmatmul.mubr.f32.gmra.mrb[0].mxu0 %v1309
    %v1406 = vpop.f32.mrb[0].mxu0
    %v1407 = vadd.f32 %v1333, %v1406
    %v1408 = vpop.f32.mrb[0].mxu0
    %1409 = vdwg.mxu0
    %v1410 = vadd.f32 %v1402, %v1206
    %v1411 = vadd.f32 %v1407, %v1207
    %s1412 = scalar_lea.vmem %s11, 1
    %v1413 = vld [vmem:[%s1412] sm:$0x1]
    %s1414 = scalar_lea.vmem %s12, 1
    %v1415 = vld [vmem:[%s1414] sm:$0x1]
    %1416 = vadd.xlane.f32.xlu0 %v1410
    %v1417 = vpop.xlane.xlu0 %1416
    %1418 = vadd.xlane.f32.xlu0 %v1411
    %v1419 = vpop.xlane.xlu0 %1418
    %v1420 = vmul.f32 %v1417, 0.03125
    %v1421 = vmul.f32 %v1419, 0.03125
    %v1422 = vsub.f32 %v1410, %v1420
    %v1423 = vsub.f32 %v1411, %v1421
    %v1424 = vmul.f32 %v1422, %v90
    %v1425 = vmul.f32 %v1423, %v90
    %v1426 = vmul.f32 %v1424, %v1424
    %v1427 = vmul.f32 %v1425, %v1425
    %1428 = vadd.xlane.f32.xlu0 %v1426
    %v1429 = vpop.xlane.xlu0 %1428
    %1430 = vadd.xlane.f32.xlu0 %v1427
    %v1431 = vpop.xlane.xlu0 %1430
    %v1432 = vmul.f32 %v1429, 0.03125
    %v1433 = vmul.f32 %v1431, 0.03125
    %v1434 = vadd.f32 %v1432, 1e-05
    %v1435 = vadd.f32 %v1433, 1e-05
    %v1436 = vrsqrt.pop %v1434
    %v1437 = vrsqrt.pop %v1435
    %v1438 = vmul.f32 %v1422, %v1436
    %v1439 = vmul.f32 %v1423, %v1437
    %v1441 = vlaneseq
    %v1442 = vshrl.u32 %v1441, 7
    %v1443 = vsub.s32 0, %v1442
    %v1444 = vrot.slane %v1413, %v1443
    %v1446 = vmul.f32 %v1444, %v1438
    %v1447 = vmul.f32 %v1444, %v1439
    %v1449 = vlaneseq
    %v1450 = vshrl.u32 %v1449, 7
    %v1451 = vsub.s32 0, %v1450
    %v1452 = vrot.slane %v1415, %v1451
    %v1454 = vadd.f32 %v1446, %v1452
    %v1455 = vadd.f32 %v1447, %v1452
    %vm1456 = vcmask 261120
    %1457 = vst.msk [vmem:[#allocation8] sm:$0xff] %vm1456, %v1454
    %1458 = vst.msk [vmem:[#allocation8 + $0x8] sm:$0xff] %vm1456, %v1455
    // Predicated region
    $region66: #{tpu_custom_call.1} parent=1 // pred_check
      _
    $region67: #{tpu_custom_call.1} parent=1 // pred_check_branch
      %1460 = sbr.rel (0) target = $region69
    $region68: #{tpu_custom_call.1} parent=1 // pred_region
      %s1462 = ssub.s32 256, 256
      %1463 = vsyncadd [#allocation4], %s1462
      %s1464 = sshll.u32 [#allocation8], 4
      %s1465 = int_to_ptr.vmem [resolvable:$true] %s1464
      %1470 = dma.vmem_to_hbm [thread:$0]  %s1465, 256, %s13, [#allocation4], 128, 128, 8
    $region69: #{tpu_custom_call.1} parent=1 // pred_fallthru
      _
    // Predicated region
    $region70: #{tpu_custom_call.1} parent=1 // pred_check
      _
    $region71: #{tpu_custom_call.1} parent=1 // pred_check_branch
      %1472 = sbr.rel (0) target = $region73
    $region72: #{tpu_custom_call.1} parent=1 // pred_region
      %1473 = dma.done [#allocation4], 256
    $region73: #{tpu_custom_call.1} parent=1 // pred_fallthru
      _
    %1474 = vsyncpa [#allocation3], 1
    %1475 = vsyncpa [#allocation6], 1
    %1476 = vsyncpa [#allocation4], 1

</llo_original>
